<compile_context>
chip_gen: v7x
topology: tpu7x:2x2x1
jax: 0.10.0
libtpu: 0.0.40
codegen_flags: <defaults>
</compile_context>

<pallas_src>
import jax
import jax.numpy as jnp
from jax.experimental import pallas as pl
from jax.experimental.pallas import tpu as pltpu

K = 3          # conv kernel size (assumed)
BN_EPS = 1e-5


# ----------------------------------------------------------------------------
# Fused kernel: 4 x (circular conv + folded BN + ReLU) -> sum-pool -> MLP head
# ----------------------------------------------------------------------------
def _conv_bn_relu(h, w_ref, b_ref):
    """One folded conv layer on a (TB, L, Cin) f32 activation block.

    w_ref: (K*Cin, Cout) bf16 with rows [tap(-1) | tap(0) | tap(+1)] (BN folded).
    b_ref: (1, Cout) f32 (BN folded).  Returns (TB, L, Cout) f32.
    """
    TB, L, Cin = h.shape
    # Circular 'same' padding: roll along the per-sample sequence axis (axis=1)
    # so the wrap stays inside each sample (never crosses the TB axis).
    h_prev = pltpu.roll(h, shift=1, axis=1)       # x[(l-1) mod L]
    h_next = pltpu.roll(h, shift=L - 1, axis=1)   # x[(l+1) mod L]

    M = TB * L
    dt = w_ref.dtype
    # Three accumulated MXU pushes of depth Cin against static sublane slices
    # of the folded weight (no (M, 3*Cin) im2col slab, no extra VMEM pass).
    acc = jnp.dot(h_prev.reshape(M, Cin).astype(dt), w_ref[0:Cin, :],
                  preferred_element_type=jnp.float32)
    acc = acc + jnp.dot(h.reshape(M, Cin).astype(dt), w_ref[Cin:2 * Cin, :],
                        preferred_element_type=jnp.float32)
    acc = acc + jnp.dot(h_next.reshape(M, Cin).astype(dt), w_ref[2 * Cin:3 * Cin, :],
                        preferred_element_type=jnp.float32)
    acc = acc + b_ref[...]                        # folded conv+BN bias (f32 VPU)
    acc = jnp.maximum(acc, 0.0)                   # ReLU (f32)
    return acc.reshape(TB, L, acc.shape[-1])


def model2_kernel(x_ref,
                  w0_ref, b0_ref, w1_ref, b1_ref,
                  w2_ref, b2_ref, w3_ref, b3_ref,
                  fc1w_ref, fc1b_ref, fc2w_ref, fc2b_ref,
                  o_ref):
    # x_ref: (TB, L, C0) f32.  o_ref: (TB, out_dim) f32 (lane-dense slab).
    h = x_ref[...]
    for w_ref, b_ref in ((w0_ref, b0_ref), (w1_ref, b1_ref),
                         (w2_ref, b2_ref), (w3_ref, b3_ref)):
        h = _conv_bn_relu(h, w_ref, b_ref)

    # torch.mean(logits, dim=-1) reduces the sequence axis (logits is (B, C, L)
    # in the PyTorch module); the 1/L is folded into fc1_w -> plain sum-reduce.
    pooled = jnp.sum(h, axis=1)                                  # (TB, C0)

    z = jnp.dot(pooled.astype(fc1w_ref.dtype), fc1w_ref[...],
                preferred_element_type=jnp.float32) + fc1b_ref[...]
    z = jnp.maximum(z, 0.0)                                      # ReLU; dropout = identity
    out = jnp.dot(z.astype(fc2w_ref.dtype), fc2w_ref[...],
                  preferred_element_type=jnp.float32) + fc2b_ref[...]
    o_ref[...] = out                                             # (TB, out_dim) store


def _pick_block_batch(batch, cap=256):
    """Largest divisor of `batch` that is <= cap (keeps VMEM within v7x limits)."""
    tb = min(batch, cap)
    while batch % tb:
        tb -= 1
    return tb


def model2_forward(params, feature):
    """feature: (B, L, feature_dim) f32 -> (B, out_dim) f32."""
    B, L, C0 = feature.shape
    conv = params["conv"]
    out_dim = params["fc2_w"].shape[1]
    TB = _pick_block_batch(B)

    flat_w = []
    for layer in conv:
        flat_w += [layer["w"], layer["b"]]
    flat_w += [params["fc1_w"], params["fc1_b"],
               params["fc2_w"], params["fc2_b"]]

    # Input: TB samples per grid step.  Weights/biases: full-array blocks with
    # constant index_maps -> VMEM-resident across the (parallel) batch grid.
    in_specs = [pl.BlockSpec((TB, L, C0), lambda b: (b, 0, 0))]
    in_specs += [pl.BlockSpec(w.shape, lambda b: (0, 0)) for w in flat_w]

    # Advisory cost hint for XLA scheduling around the fused custom call.
    flops = 0
    for layer in conv:
        kcin, cout = layer["w"].shape
        flops += 2 * B * L * kcin * cout
    flops += 2 * B * params["fc1_w"].shape[0] * params["fc1_w"].shape[1]
    flops += 2 * B * params["fc2_w"].shape[0] * params["fc2_w"].shape[1]
    bytes_accessed = (feature.size * 4 + B * out_dim * 4 +
                      sum(int(w.size) * w.dtype.itemsize for w in flat_w))
    cost = pl.CostEstimate(flops=int(flops), transcendentals=0,
                           bytes_accessed=int(bytes_accessed))

    out = pl.pallas_call(
        model2_kernel,
        out_shape=jax.ShapeDtypeStruct((B, out_dim), jnp.float32),
        grid=(B // TB,),
        in_specs=in_specs,
        out_specs=pl.BlockSpec((TB, out_dim), lambda b: (b, 0)),
        compiler_params=pltpu.CompilerParams(
            dimension_semantics=("parallel",),
            vmem_limit_bytes=32 * 1024 * 1024,
        ),
        cost_estimate=cost,
    )(feature, *flat_w)
    return out


model2_forward = jax.jit(model2_forward)


# ----------------------------------------------------------------------------
# Parameters: raw (PyTorch-like) init + one-time folding/prep for the kernel
# ----------------------------------------------------------------------------
def init_model2_params(key, feature_dim, conv_hidden_dim, out_dim):
    """Raw (unfused) parameters mirroring the PyTorch module structure."""
    dims = [(feature_dim, feature_dim),
            (feature_dim, conv_hidden_dim),
            (conv_hidden_dim, conv_hidden_dim),
            (conv_hidden_dim, feature_dim)]
    params = {"conv": []}
    for cin, cout in dims:
        key, k1, k2, k3, k4 = jax.random.split(key, 5)
        params["conv"].append({
            "w": jax.random.normal(k1, (K, cin, cout), jnp.float32) * (1.0 / (cin * K) ** 0.5),
            "b": jax.random.normal(k2, (1, cout), jnp.float32) * 0.01,
            "gamma": 1.0 + 0.01 * jax.random.normal(k3, (1, cout), jnp.float32),
            "beta": 0.01 * jax.random.normal(k4, (1, cout), jnp.float32),
        })
    h2 = int(conv_hidden_dim * 0.5)
    key, k1, k2, k3, k4 = jax.random.split(key, 5)
    params["fc1_w"] = jax.random.normal(k1, (feature_dim, h2), jnp.float32) * (1.0 / feature_dim ** 0.5)
    params["fc1_b"] = jax.random.normal(k2, (1, h2), jnp.float32) * 0.01
    params["fc2_w"] = jax.random.normal(k3, (h2, out_dim), jnp.float32) * (1.0 / h2 ** 0.5)
    params["fc2_b"] = jax.random.normal(k4, (1, out_dim), jnp.float32) * 0.01
    return params


def prepare_params(raw, seq_len):
    """One-time prep: fold eval-BN into conv weight/bias, fold 1/L of the mean
    into fc1_w, reshape conv weights to (K*Cin, Cout) tap-stacked layout, cast
    matmul weights to bf16 (biases stay f32)."""
    prepped = {"conv": []}
    for layer in raw["conv"]:
        scale = layer["gamma"] * (1.0 + BN_EPS) ** -0.5          # (1, Cout)
        w = layer["w"] * scale                                    # (K, Cin, Cout) scaled on Cout
        b = layer["b"] * scale + layer["beta"]                    # (1, Cout)
        kk, cin, cout = w.shape
        prepped["conv"].append({
            "w": w.reshape(kk * cin, cout).astype(jnp.bfloat16),  # rows: [tap-1|tap0|tap+1]
            "b": b.astype(jnp.float32),
        })
    prepped["fc1_w"] = (raw["fc1_w"] / float(seq_len)).astype(jnp.bfloat16)
    prepped["fc1_b"] = raw["fc1_b"].astype(jnp.float32)
    prepped["fc2_w"] = raw["fc2_w"].astype(jnp.bfloat16)
    prepped["fc2_b"] = raw["fc2_b"].astype(jnp.float32)
    return prepped


if __name__ == "__main__":
    # Small demo shapes; channel-like dims chosen as multiples of 128 so every
    # matmul operand and the output store are lane-dense; L is a multiple of 8
    # so the (TB, L, C) -> (TB*L, C) reshape is layout-free.
    B, L = 2, 16
    feature_dim, conv_hidden_dim, out_dim = 128, 256, 128

    key = jax.random.PRNGKey(0)
    key, pkey, xkey = jax.random.split(key, 3)
    raw_params = init_model2_params(pkey, feature_dim, conv_hidden_dim, out_dim)
    params = prepare_params(raw_params, seq_len=L)

    # PyTorch Model2 takes `feature` (B, L, feature_dim) and transposes to
    # (B, C, L) for Conv1d; our kernel is channels-last, so no transpose needed.
    feature = jax.random.normal(xkey, (B, L, feature_dim), jnp.float32)

    out = model2_forward(params, feature)
    out = jax.block_until_ready(out)
    assert out.shape == (B, out_dim)
    print("KERNEL_OK")
</pallas_src>

<mosaic_0001>
module attributes {stable_mosaic.version = 11 : i64} {
  func.func @model2_kernel(%arg0: i32, %arg1: memref<2x16x128xf32, #tpu.memory_space<vmem>>, %arg2: memref<384x128xbf16, #tpu.memory_space<vmem>>, %arg3: memref<1x128xf32, #tpu.memory_space<vmem>>, %arg4: memref<384x256xbf16, #tpu.memory_space<vmem>>, %arg5: memref<1x256xf32, #tpu.memory_space<vmem>>, %arg6: memref<768x256xbf16, #tpu.memory_space<vmem>>, %arg7: memref<1x256xf32, #tpu.memory_space<vmem>>, %arg8: memref<768x128xbf16, #tpu.memory_space<vmem>>, %arg9: memref<1x128xf32, #tpu.memory_space<vmem>>, %arg10: memref<128x128xbf16, #tpu.memory_space<vmem>>, %arg11: memref<1x128xf32, #tpu.memory_space<vmem>>, %arg12: memref<128x128xbf16, #tpu.memory_space<vmem>>, %arg13: memref<1x128xf32, #tpu.memory_space<vmem>>, %arg14: memref<2x128xf32, #tpu.memory_space<vmem>>) attributes {dimension_semantics = [#tpu.dimension_semantics<parallel>], iteration_bounds = array<i64: 1>, scalar_prefetch = 0 : i64, scratch_operands = 0 : i64, tpu.core_type = #tpu.core_type<tc>, window_params = [{transform_indices = @transform_0, window_bounds = array<i64: 2, 16, 128>}, {pipeline_mode = #tpu.pipeline_mode<synchronous>, transform_indices = @transform_1, window_bounds = array<i64: 384, 128>}, {pipeline_mode = #tpu.pipeline_mode<synchronous>, transform_indices = @transform_2, window_bounds = array<i64: 1, 128>}, {pipeline_mode = #tpu.pipeline_mode<synchronous>, transform_indices = @transform_3, window_bounds = array<i64: 384, 256>}, {pipeline_mode = #tpu.pipeline_mode<synchronous>, transform_indices = @transform_4, window_bounds = array<i64: 1, 256>}, {pipeline_mode = #tpu.pipeline_mode<synchronous>, transform_indices = @transform_5, window_bounds = array<i64: 768, 256>}, {pipeline_mode = #tpu.pipeline_mode<synchronous>, transform_indices = @transform_6, window_bounds = array<i64: 1, 256>}, {pipeline_mode = #tpu.pipeline_mode<synchronous>, transform_indices = @transform_7, window_bounds = array<i64: 768, 128>}, {pipeline_mode = #tpu.pipeline_mode<synchronous>, transform_indices = @transform_8, window_bounds = array<i64: 1, 128>}, {pipeline_mode = #tpu.pipeline_mode<synchronous>, transform_indices = @transform_9, window_bounds = array<i64: 128, 128>}, {pipeline_mode = #tpu.pipeline_mode<synchronous>, transform_indices = @transform_10, window_bounds = array<i64: 1, 128>}, {pipeline_mode = #tpu.pipeline_mode<synchronous>, transform_indices = @transform_11, window_bounds = array<i64: 128, 128>}, {pipeline_mode = #tpu.pipeline_mode<synchronous>, transform_indices = @transform_12, window_bounds = array<i64: 1, 128>}, {transform_indices = @transform_13, window_bounds = array<i64: 2, 128>}]} {
    %c0 = arith.constant 0 : index
    %c0_0 = arith.constant 0 : index
    %c0_1 = arith.constant 0 : index
    %0 = vector.load %arg1[%c0, %c0_0, %c0_1] : memref<2x16x128xf32, #tpu.memory_space<vmem>>, vector<2x16x128xf32>
    %c1_i32 = arith.constant 1 : i32
    %1 = tpu.dynamic_rotate %0 by %c1_i32 dim 1 : vector<2x16x128xf32>, i32 -> vector<2x16x128xf32>
    %c15_i32 = arith.constant 15 : i32
    %2 = tpu.dynamic_rotate %0 by %c15_i32 dim 1 : vector<2x16x128xf32>, i32 -> vector<2x16x128xf32>
    %3 = vector.shape_cast %1 : vector<2x16x128xf32> to vector<32x128xf32>
    %4 = arith.truncf %3 : vector<32x128xf32> to vector<32x128xbf16>
    %c0_2 = arith.constant 0 : index
    %c0_3 = arith.constant 0 : index
    %5 = vector.load %arg2[%c0_2, %c0_3] : memref<384x128xbf16, #tpu.memory_space<vmem>>, vector<128x128xbf16>
    %cst = arith.constant dense<0.000000e+00> : vector<32x128xf32>
    %6 = tpu.matmul %4, %5, %cst {dimension_numbers = #tpu.dot_dimension_numbers<[1], [0], [0], [1], [0, 0, 1, 1], [], []>} : vector<32x128xbf16>, vector<128x128xbf16>, vector<32x128xf32> -> vector<32x128xf32>
    %7 = vector.shape_cast %0 : vector<2x16x128xf32> to vector<32x128xf32>
    %8 = arith.truncf %7 : vector<32x128xf32> to vector<32x128xbf16>
    %c128 = arith.constant 128 : index
    %c0_4 = arith.constant 0 : index
    %9 = vector.load %arg2[%c128, %c0_4] : memref<384x128xbf16, #tpu.memory_space<vmem>>, vector<128x128xbf16>
    %cst_5 = arith.constant dense<0.000000e+00> : vector<32x128xf32>
    %10 = tpu.matmul %8, %9, %cst_5 {dimension_numbers = #tpu.dot_dimension_numbers<[1], [0], [0], [1], [0, 0, 1, 1], [], []>} : vector<32x128xbf16>, vector<128x128xbf16>, vector<32x128xf32> -> vector<32x128xf32>
    %11 = arith.addf %6, %10 : vector<32x128xf32>
    %12 = vector.shape_cast %2 : vector<2x16x128xf32> to vector<32x128xf32>
    %13 = arith.truncf %12 : vector<32x128xf32> to vector<32x128xbf16>
    %c256 = arith.constant 256 : index
    %c0_6 = arith.constant 0 : index
    %14 = vector.load %arg2[%c256, %c0_6] : memref<384x128xbf16, #tpu.memory_space<vmem>>, vector<128x128xbf16>
    %cst_7 = arith.constant dense<0.000000e+00> : vector<32x128xf32>
    %15 = tpu.matmul %13, %14, %cst_7 {dimension_numbers = #tpu.dot_dimension_numbers<[1], [0], [0], [1], [0, 0, 1, 1], [], []>} : vector<32x128xbf16>, vector<128x128xbf16>, vector<32x128xf32> -> vector<32x128xf32>
    %16 = arith.addf %11, %15 : vector<32x128xf32>
    %c0_8 = arith.constant 0 : index
    %c0_9 = arith.constant 0 : index
    %17 = vector.load %arg3[%c0_8, %c0_9] : memref<1x128xf32, #tpu.memory_space<vmem>>, vector<1x128xf32>
    %18 = vector.broadcast %17 : vector<1x128xf32> to vector<32x128xf32>
    %19 = arith.addf %16, %18 : vector<32x128xf32>
    %cst_10 = arith.constant 0.000000e+00 : f32
    %20 = vector.broadcast %cst_10 : f32 to vector<32x128xf32>
    %21 = arith.maximumf %19, %20 : vector<32x128xf32>
    %22 = vector.shape_cast %21 : vector<32x128xf32> to vector<2x16x128xf32>
    %c1_i32_11 = arith.constant 1 : i32
    %23 = tpu.dynamic_rotate %22 by %c1_i32_11 dim 1 : vector<2x16x128xf32>, i32 -> vector<2x16x128xf32>
    %c15_i32_12 = arith.constant 15 : i32
    %24 = tpu.dynamic_rotate %22 by %c15_i32_12 dim 1 : vector<2x16x128xf32>, i32 -> vector<2x16x128xf32>
    %25 = vector.shape_cast %23 : vector<2x16x128xf32> to vector<32x128xf32>
    %26 = arith.truncf %25 : vector<32x128xf32> to vector<32x128xbf16>
    %c0_13 = arith.constant 0 : index
    %c0_14 = arith.constant 0 : index
    %27 = vector.load %arg4[%c0_13, %c0_14] : memref<384x256xbf16, #tpu.memory_space<vmem>>, vector<128x256xbf16>
    %cst_15 = arith.constant dense<0.000000e+00> : vector<32x256xf32>
    %28 = tpu.matmul %26, %27, %cst_15 {dimension_numbers = #tpu.dot_dimension_numbers<[1], [0], [0], [1], [0, 0, 1, 1], [], []>} : vector<32x128xbf16>, vector<128x256xbf16>, vector<32x256xf32> -> vector<32x256xf32>
    %29 = vector.shape_cast %22 : vector<2x16x128xf32> to vector<32x128xf32>
    %30 = arith.truncf %29 : vector<32x128xf32> to vector<32x128xbf16>
    %c128_16 = arith.constant 128 : index
    %c0_17 = arith.constant 0 : index
    %31 = vector.load %arg4[%c128_16, %c0_17] : memref<384x256xbf16, #tpu.memory_space<vmem>>, vector<128x256xbf16>
    %cst_18 = arith.constant dense<0.000000e+00> : vector<32x256xf32>
    %32 = tpu.matmul %30, %31, %cst_18 {dimension_numbers = #tpu.dot_dimension_numbers<[1], [0], [0], [1], [0, 0, 1, 1], [], []>} : vector<32x128xbf16>, vector<128x256xbf16>, vector<32x256xf32> -> vector<32x256xf32>
    %33 = arith.addf %28, %32 : vector<32x256xf32>
    %34 = vector.shape_cast %24 : vector<2x16x128xf32> to vector<32x128xf32>
    %35 = arith.truncf %34 : vector<32x128xf32> to vector<32x128xbf16>
    %c256_19 = arith.constant 256 : index
    %c0_20 = arith.constant 0 : index
    %36 = vector.load %arg4[%c256_19, %c0_20] : memref<384x256xbf16, #tpu.memory_space<vmem>>, vector<128x256xbf16>
    %cst_21 = arith.constant dense<0.000000e+00> : vector<32x256xf32>
    %37 = tpu.matmul %35, %36, %cst_21 {dimension_numbers = #tpu.dot_dimension_numbers<[1], [0], [0], [1], [0, 0, 1, 1], [], []>} : vector<32x128xbf16>, vector<128x256xbf16>, vector<32x256xf32> -> vector<32x256xf32>
    %38 = arith.addf %33, %37 : vector<32x256xf32>
    %c0_22 = arith.constant 0 : index
    %c0_23 = arith.constant 0 : index
    %39 = vector.load %arg5[%c0_22, %c0_23] : memref<1x256xf32, #tpu.memory_space<vmem>>, vector<1x256xf32>
    %40 = vector.broadcast %39 : vector<1x256xf32> to vector<32x256xf32>
    %41 = arith.addf %38, %40 : vector<32x256xf32>
    %cst_24 = arith.constant 0.000000e+00 : f32
    %42 = vector.broadcast %cst_24 : f32 to vector<32x256xf32>
    %43 = arith.maximumf %41, %42 : vector<32x256xf32>
    %44 = vector.shape_cast %43 : vector<32x256xf32> to vector<2x16x256xf32>
    %c1_i32_25 = arith.constant 1 : i32
    %45 = tpu.dynamic_rotate %44 by %c1_i32_25 dim 1 : vector<2x16x256xf32>, i32 -> vector<2x16x256xf32>
    %c15_i32_26 = arith.constant 15 : i32
    %46 = tpu.dynamic_rotate %44 by %c15_i32_26 dim 1 : vector<2x16x256xf32>, i32 -> vector<2x16x256xf32>
    %47 = vector.shape_cast %45 : vector<2x16x256xf32> to vector<32x256xf32>
    %48 = arith.truncf %47 : vector<32x256xf32> to vector<32x256xbf16>
    %c0_27 = arith.constant 0 : index
    %c0_28 = arith.constant 0 : index
    %49 = vector.load %arg6[%c0_27, %c0_28] : memref<768x256xbf16, #tpu.memory_space<vmem>>, vector<256x256xbf16>
    %cst_29 = arith.constant dense<0.000000e+00> : vector<32x256xf32>
    %50 = tpu.matmul %48, %49, %cst_29 {dimension_numbers = #tpu.dot_dimension_numbers<[1], [0], [0], [1], [0, 0, 1, 1], [], []>} : vector<32x256xbf16>, vector<256x256xbf16>, vector<32x256xf32> -> vector<32x256xf32>
    %51 = vector.shape_cast %44 : vector<2x16x256xf32> to vector<32x256xf32>
    %52 = arith.truncf %51 : vector<32x256xf32> to vector<32x256xbf16>
    %c256_30 = arith.constant 256 : index
    %c0_31 = arith.constant 0 : index
    %53 = vector.load %arg6[%c256_30, %c0_31] : memref<768x256xbf16, #tpu.memory_space<vmem>>, vector<256x256xbf16>
    %cst_32 = arith.constant dense<0.000000e+00> : vector<32x256xf32>
    %54 = tpu.matmul %52, %53, %cst_32 {dimension_numbers = #tpu.dot_dimension_numbers<[1], [0], [0], [1], [0, 0, 1, 1], [], []>} : vector<32x256xbf16>, vector<256x256xbf16>, vector<32x256xf32> -> vector<32x256xf32>
    %55 = arith.addf %50, %54 : vector<32x256xf32>
    %56 = vector.shape_cast %46 : vector<2x16x256xf32> to vector<32x256xf32>
    %57 = arith.truncf %56 : vector<32x256xf32> to vector<32x256xbf16>
    %c512 = arith.constant 512 : index
    %c0_33 = arith.constant 0 : index
    %58 = vector.load %arg6[%c512, %c0_33] : memref<768x256xbf16, #tpu.memory_space<vmem>>, vector<256x256xbf16>
    %cst_34 = arith.constant dense<0.000000e+00> : vector<32x256xf32>
    %59 = tpu.matmul %57, %58, %cst_34 {dimension_numbers = #tpu.dot_dimension_numbers<[1], [0], [0], [1], [0, 0, 1, 1], [], []>} : vector<32x256xbf16>, vector<256x256xbf16>, vector<32x256xf32> -> vector<32x256xf32>
    %60 = arith.addf %55, %59 : vector<32x256xf32>
    %c0_35 = arith.constant 0 : index
    %c0_36 = arith.constant 0 : index
    %61 = vector.load %arg7[%c0_35, %c0_36] : memref<1x256xf32, #tpu.memory_space<vmem>>, vector<1x256xf32>
    %62 = vector.broadcast %61 : vector<1x256xf32> to vector<32x256xf32>
    %63 = arith.addf %60, %62 : vector<32x256xf32>
    %cst_37 = arith.constant 0.000000e+00 : f32
    %64 = vector.broadcast %cst_37 : f32 to vector<32x256xf32>
    %65 = arith.maximumf %63, %64 : vector<32x256xf32>
    %66 = vector.shape_cast %65 : vector<32x256xf32> to vector<2x16x256xf32>
    %c1_i32_38 = arith.constant 1 : i32
    %67 = tpu.dynamic_rotate %66 by %c1_i32_38 dim 1 : vector<2x16x256xf32>, i32 -> vector<2x16x256xf32>
    %c15_i32_39 = arith.constant 15 : i32
    %68 = tpu.dynamic_rotate %66 by %c15_i32_39 dim 1 : vector<2x16x256xf32>, i32 -> vector<2x16x256xf32>
    %69 = vector.shape_cast %67 : vector<2x16x256xf32> to vector<32x256xf32>
    %70 = arith.truncf %69 : vector<32x256xf32> to vector<32x256xbf16>
    %c0_40 = arith.constant 0 : index
    %c0_41 = arith.constant 0 : index
    %71 = vector.load %arg8[%c0_40, %c0_41] : memref<768x128xbf16, #tpu.memory_space<vmem>>, vector<256x128xbf16>
    %cst_42 = arith.constant dense<0.000000e+00> : vector<32x128xf32>
    %72 = tpu.matmul %70, %71, %cst_42 {dimension_numbers = #tpu.dot_dimension_numbers<[1], [0], [0], [1], [0, 0, 1, 1], [], []>} : vector<32x256xbf16>, vector<256x128xbf16>, vector<32x128xf32> -> vector<32x128xf32>
    %73 = vector.shape_cast %66 : vector<2x16x256xf32> to vector<32x256xf32>
    %74 = arith.truncf %73 : vector<32x256xf32> to vector<32x256xbf16>
    %c256_43 = arith.constant 256 : index
    %c0_44 = arith.constant 0 : index
    %75 = vector.load %arg8[%c256_43, %c0_44] : memref<768x128xbf16, #tpu.memory_space<vmem>>, vector<256x128xbf16>
    %cst_45 = arith.constant dense<0.000000e+00> : vector<32x128xf32>
    %76 = tpu.matmul %74, %75, %cst_45 {dimension_numbers = #tpu.dot_dimension_numbers<[1], [0], [0], [1], [0, 0, 1, 1], [], []>} : vector<32x256xbf16>, vector<256x128xbf16>, vector<32x128xf32> -> vector<32x128xf32>
    %77 = arith.addf %72, %76 : vector<32x128xf32>
    %78 = vector.shape_cast %68 : vector<2x16x256xf32> to vector<32x256xf32>
    %79 = arith.truncf %78 : vector<32x256xf32> to vector<32x256xbf16>
    %c512_46 = arith.constant 512 : index
    %c0_47 = arith.constant 0 : index
    %80 = vector.load %arg8[%c512_46, %c0_47] : memref<768x128xbf16, #tpu.memory_space<vmem>>, vector<256x128xbf16>
    %cst_48 = arith.constant dense<0.000000e+00> : vector<32x128xf32>
    %81 = tpu.matmul %79, %80, %cst_48 {dimension_numbers = #tpu.dot_dimension_numbers<[1], [0], [0], [1], [0, 0, 1, 1], [], []>} : vector<32x256xbf16>, vector<256x128xbf16>, vector<32x128xf32> -> vector<32x128xf32>
    %82 = arith.addf %77, %81 : vector<32x128xf32>
    %c0_49 = arith.constant 0 : index
    %c0_50 = arith.constant 0 : index
    %83 = vector.load %arg9[%c0_49, %c0_50] : memref<1x128xf32, #tpu.memory_space<vmem>>, vector<1x128xf32>
    %84 = vector.broadcast %83 : vector<1x128xf32> to vector<32x128xf32>
    %85 = arith.addf %82, %84 : vector<32x128xf32>
    %cst_51 = arith.constant 0.000000e+00 : f32
    %86 = vector.broadcast %cst_51 : f32 to vector<32x128xf32>
    %87 = arith.maximumf %85, %86 : vector<32x128xf32>
    %88 = vector.shape_cast %87 : vector<32x128xf32> to vector<2x16x128xf32>
    %cst_52 = arith.constant dense<0.000000e+00> : vector<2x128xf32>
    %89 = vector.multi_reduction <add>, %88, %cst_52 [1] : vector<2x16x128xf32> to vector<2x128xf32>
    %90 = arith.truncf %89 : vector<2x128xf32> to vector<2x128xbf16>
    %c0_53 = arith.constant 0 : index
    %c0_54 = arith.constant 0 : index
    %91 = vector.load %arg10[%c0_53, %c0_54] : memref<128x128xbf16, #tpu.memory_space<vmem>>, vector<128x128xbf16>
    %cst_55 = arith.constant dense<0.000000e+00> : vector<2x128xf32>
    %92 = tpu.matmul %90, %91, %cst_55 {dimension_numbers = #tpu.dot_dimension_numbers<[1], [0], [0], [1], [0, 0, 1, 1], [], []>} : vector<2x128xbf16>, vector<128x128xbf16>, vector<2x128xf32> -> vector<2x128xf32>
    %c0_56 = arith.constant 0 : index
    %c0_57 = arith.constant 0 : index
    %93 = vector.load %arg11[%c0_56, %c0_57] : memref<1x128xf32, #tpu.memory_space<vmem>>, vector<1x128xf32>
    %94 = vector.broadcast %93 : vector<1x128xf32> to vector<2x128xf32>
    %95 = arith.addf %92, %94 : vector<2x128xf32>
    %cst_58 = arith.constant 0.000000e+00 : f32
    %96 = vector.broadcast %cst_58 : f32 to vector<2x128xf32>
    %97 = arith.maximumf %95, %96 : vector<2x128xf32>
    %98 = arith.truncf %97 : vector<2x128xf32> to vector<2x128xbf16>
    %c0_59 = arith.constant 0 : index
    %c0_60 = arith.constant 0 : index
    %99 = vector.load %arg12[%c0_59, %c0_60] : memref<128x128xbf16, #tpu.memory_space<vmem>>, vector<128x128xbf16>
    %cst_61 = arith.constant dense<0.000000e+00> : vector<2x128xf32>
    %100 = tpu.matmul %98, %99, %cst_61 {dimension_numbers = #tpu.dot_dimension_numbers<[1], [0], [0], [1], [0, 0, 1, 1], [], []>} : vector<2x128xbf16>, vector<128x128xbf16>, vector<2x128xf32> -> vector<2x128xf32>
    %c0_62 = arith.constant 0 : index
    %c0_63 = arith.constant 0 : index
    %101 = vector.load %arg13[%c0_62, %c0_63] : memref<1x128xf32, #tpu.memory_space<vmem>>, vector<1x128xf32>
    %102 = vector.broadcast %101 : vector<1x128xf32> to vector<2x128xf32>
    %103 = arith.addf %100, %102 : vector<2x128xf32>
    %c0_64 = arith.constant 0 : index
    %c0_65 = arith.constant 0 : index
    %104 = vector.load %arg14[%c0_64, %c0_65] : memref<2x128xf32, #tpu.memory_space<vmem>>, vector<2x128xf32>
    tpu.vector_store %arg14[%c0_64, %c0_65], %103 {strides = array<i32>} : memref<2x128xf32, #tpu.memory_space<vmem>>, vector<2x128xf32>,
    return
  }
  func.func @transform_0(%arg0: i32) -> (i32, i32, i32) {
    %c0_i32 = arith.constant 0 : i32
    %c0_i32_0 = arith.constant 0 : i32
    %c0_i32_1 = arith.constant 0 : i32
    return %arg0, %c0_i32, %c0_i32_0 : i32, i32, i32
  }
  func.func @transform_1(%arg0: i32) -> (i32, i32) {
    %c0_i32 = arith.constant 0 : i32
    %c0_i32_0 = arith.constant 0 : i32
    %c0_i32_1 = arith.constant 0 : i32
    return %c0_i32, %c0_i32_0 : i32, i32
  }
  func.func @transform_2(%arg0: i32) -> (i32, i32) {
    %c0_i32 = arith.constant 0 : i32
    %c0_i32_0 = arith.constant 0 : i32
    %c0_i32_1 = arith.constant 0 : i32
    return %c0_i32, %c0_i32_0 : i32, i32
  }
  func.func @transform_3(%arg0: i32) -> (i32, i32) {
    %c0_i32 = arith.constant 0 : i32
    %c0_i32_0 = arith.constant 0 : i32
    %c0_i32_1 = arith.constant 0 : i32
    return %c0_i32, %c0_i32_0 : i32, i32
  }
  func.func @transform_4(%arg0: i32) -> (i32, i32) {
    %c0_i32 = arith.constant 0 : i32
    %c0_i32_0 = arith.constant 0 : i32
    %c0_i32_1 = arith.constant 0 : i32
    return %c0_i32, %c0_i32_0 : i32, i32
  }
  func.func @transform_5(%arg0: i32) -> (i32, i32) {
    %c0_i32 = arith.constant 0 : i32
    %c0_i32_0 = arith.constant 0 : i32
    %c0_i32_1 = arith.constant 0 : i32
    return %c0_i32, %c0_i32_0 : i32, i32
  }
  func.func @transform_6(%arg0: i32) -> (i32, i32) {
    %c0_i32 = arith.constant 0 : i32
    %c0_i32_0 = arith.constant 0 : i32
    %c0_i32_1 = arith.constant 0 : i32
    return %c0_i32, %c0_i32_0 : i32, i32
  }
  func.func @transform_7(%arg0: i32) -> (i32, i32) {
    %c0_i32 = arith.constant 0 : i32
    %c0_i32_0 = arith.constant 0 : i32
    %c0_i32_1 = arith.constant 0 : i32
    return %c0_i32, %c0_i32_0 : i32, i32
  }
  func.func @transform_8(%arg0: i32) -> (i32, i32) {
    %c0_i32 = arith.constant 0 : i32
    %c0_i32_0 = arith.constant 0 : i32
    %c0_i32_1 = arith.constant 0 : i32
    return %c0_i32, %c0_i32_0 : i32, i32
  }
  func.func @transform_9(%arg0: i32) -> (i32, i32) {
    %c0_i32 = arith.constant 0 : i32
    %c0_i32_0 = arith.constant 0 : i32
    %c0_i32_1 = arith.constant 0 : i32
    return %c0_i32, %c0_i32_0 : i32, i32
  }
  func.func @transform_10(%arg0: i32) -> (i32, i32) {
    %c0_i32 = arith.constant 0 : i32
    %c0_i32_0 = arith.constant 0 : i32
    %c0_i32_1 = arith.constant 0 : i32
    return %c0_i32, %c0_i32_0 : i32, i32
  }
  func.func @transform_11(%arg0: i32) -> (i32, i32) {
    %c0_i32 = arith.constant 0 : i32
    %c0_i32_0 = arith.constant 0 : i32
    %c0_i32_1 = arith.constant 0 : i32
    return %c0_i32, %c0_i32_0 : i32, i32
  }
  func.func @transform_12(%arg0: i32) -> (i32, i32) {
    %c0_i32 = arith.constant 0 : i32
    %c0_i32_0 = arith.constant 0 : i32
    %c0_i32_1 = arith.constant 0 : i32
    return %c0_i32, %c0_i32_0 : i32, i32
  }
  func.func @transform_13(%arg0: i32) -> (i32, i32) {
    %c0_i32 = arith.constant 0 : i32
    %c0_i32_0 = arith.constant 0 : i32
    return %arg0, %c0_i32 : i32, i32
  }
}

</mosaic_0001>

<llo_original>
// kernel: model2_forward.1
$region0: #{model2_forward.1}
  #allocation0 [shape = 'u32[]', space=smem, size = 0x4, offset = 0x4, fixed_abs, tag = 'smem constant byte address 0x4 - core index']
  #allocation1 [shape = 'u32[144,128]{1,0:T(1,128)}', space=vmem, size = 0x12000, scoped, tag = 'internal scratch']
  %s0 = inlined_call_operand.vmem [shape: f32[2,16,128], index: 0, kind: input, shape index: {}]
  %s1 = inlined_call_operand.hbm [shape: bf16[384,128], index: 1, kind: input, shape index: {}]
  %s2 = inlined_call_operand.hbm [shape: f32[1,128], index: 2, kind: input, shape index: {}]
  %s3 = inlined_call_operand.hbm [shape: bf16[384,256], index: 3, kind: input, shape index: {}]
  %s4 = inlined_call_operand.vmem [shape: f32[1,256], index: 4, kind: input, shape index: {}]
  %s5 = inlined_call_operand.hbm [shape: bf16[768,256], index: 5, kind: input, shape index: {}]
  %s6 = inlined_call_operand.vmem [shape: f32[1,256], index: 6, kind: input, shape index: {}]
  %s7 = inlined_call_operand.hbm [shape: bf16[768,128], index: 7, kind: input, shape index: {}]
  %s8 = inlined_call_operand.vmem [shape: f32[1,128], index: 8, kind: input, shape index: {}]
  %s9 = inlined_call_operand.hbm [shape: bf16[128,128], index: 9, kind: input, shape index: {}]
  %s10 = inlined_call_operand.vmem [shape: f32[1,128], index: 10, kind: input, shape index: {}]
  %s11 = inlined_call_operand.hbm [shape: bf16[128,128], index: 11, kind: input, shape index: {}]
  %s12 = inlined_call_operand.vmem [shape: f32[1,128], index: 12, kind: input, shape index: {}]
  %s13 = inlined_call_operand.hbm [shape: f32[2,128], index: 13, kind: output, shape index: {}]
  %s14 = sld [smem:[#allocation0]]
  $region90: #{model2_forward.1} parent=0
    _
  %s16 = ssub.s32 1, %s14
  %s17 = scalar_select 0, %s16, %s14
  $region1: #{model2_forward.1} parent=0
    #allocation2 [shape = 'u8[98304]{0}', space=vmem, size = 0x18000, scoped, tag = 'input window, operand 1, single buffered']
    #allocation3 [shape = 's32[1]{0}', space=sflag, size = 0x4, scoped, tag = 'scoped memory for model2_forward.1']
    #allocation4 [shape = 's32[1]{0}', space=sflag, size = 0x4, scoped, tag = 'scoped memory for model2_forward.1']
    #allocation5 [shape = 'u8[512]{0}', space=vmem, size = 0x400, scoped, tag = 'input window, operand 2, single buffered']
    #allocation6 [shape = 's32[1]{0}', space=sflag, size = 0x4, scoped, tag = 'scoped memory for model2_forward.1']
    #allocation7 [shape = 'u8[196608]{0}', space=vmem, size = 0x30000, scoped, tag = 'input window, operand 3, single buffered']
    #allocation8 [shape = 'u8[393216]{0}', space=vmem, size = 0x60000, scoped, tag = 'input window, operand 5, single buffered']
    #allocation9 [shape = 's32[1]{0}', space=sflag, size = 0x4, scoped, tag = 'scoped memory for model2_forward.1']
    #allocation10 [shape = 'u8[196608]{0}', space=vmem, size = 0x30000, scoped, tag = 'input window, operand 7, single buffered']
    #allocation11 [shape = 'u8[32768]{0}', space=vmem, size = 0x8000, scoped, tag = 'input window, operand 9, single buffered']
    #allocation12 [shape = 's32[1]{0}', space=sflag, size = 0x4, scoped, tag = 'scoped memory for model2_forward.1']
    #allocation13 [shape = 'u8[32768]{0}', space=vmem, size = 0x8000, scoped, tag = 'input window, operand 11, single buffered']
    #allocation14 [shape = 'u8[1024]{0}', space=vmem, size = 0x400, scoped, tag = 'output window, operand 0, single buffered']
    %18 = vsyncpa [#allocation3], 0
    %19 = vsyncpa [#allocation6], 0
    %20 = vsyncpa [#allocation9], 0
    %21 = vsyncpa [#allocation12], 0
    %22 = vsyncpa [#allocation4], 0
    // Predicated region
    $region2: #{model2_forward.1} parent=1 // pred_check
      _
    $region3: #{model2_forward.1} parent=1 // pred_check_branch
      %24 = sbr.rel (0) target = $region5
    $region4: #{model2_forward.1} parent=1 // pred_region
      _
    $region5: #{model2_forward.1} parent=1 // pred_fallthru
      _
    // Predicated region
    $region6: #{model2_forward.1} parent=1 // pred_check
      _
    $region7: #{model2_forward.1} parent=1 // pred_check_branch
      %26 = sbr.rel (0) target = $region9
    $region8: #{model2_forward.1} parent=1 // pred_region
      %s28 = ssub.s32 3072, 3072
      %29 = vsyncadd [#allocation3], %s28
      %s30 = sshll.u32 [#allocation2], 4
      %s31 = int_to_ptr.vmem [resolvable:$true] %s30
      %36 = dma.hbm_to_vmem [thread:$0]  %s1, 3072, %s31, [#allocation3], 64, 64, 4
    $region9: #{model2_forward.1} parent=1 // pred_fallthru
      _
    // Predicated region
    $region10: #{model2_forward.1} parent=1 // pred_check
      _
    $region11: #{model2_forward.1} parent=1 // pred_check_branch
      %38 = sbr.rel (0) target = $region13
    $region12: #{model2_forward.1} parent=1 // pred_region
      %s40 = ssub.s32 16, 16
      %41 = vsyncadd [#allocation6], %s40
      %s43 = sshll.u32 [#allocation5], 4
      %s44 = int_to_ptr.vmem [resolvable:$true] %s43
      %46 = dma.hbm_to_vmem [thread:$0]  %s2, 16, %s44, [#allocation6]
    $region13: #{model2_forward.1} parent=1 // pred_fallthru
      _
    // Predicated region
    $region14: #{model2_forward.1} parent=1 // pred_check
      _
    $region15: #{model2_forward.1} parent=1 // pred_check_branch
      %48 = sbr.rel (0) target = $region17
    $region16: #{model2_forward.1} parent=1 // pred_region
      %s50 = ssub.s32 6144, 6144
      %51 = vsyncadd [#allocation6], %s50
      %s52 = sshll.u32 [#allocation7], 4
      %s53 = int_to_ptr.vmem [resolvable:$true] %s52
      %58 = dma.hbm_to_vmem [thread:$0]  %s3, 6144, %s53, [#allocation6], 128, 128, 8
    $region17: #{model2_forward.1} parent=1 // pred_fallthru
      _
    // Predicated region
    $region18: #{model2_forward.1} parent=1 // pred_check
      _
    $region19: #{model2_forward.1} parent=1 // pred_check_branch
      %60 = sbr.rel (0) target = $region21
    $region20: #{model2_forward.1} parent=1 // pred_region
      _
    $region21: #{model2_forward.1} parent=1 // pred_fallthru
      _
    // Predicated region
    $region22: #{model2_forward.1} parent=1 // pred_check
      _
    $region23: #{model2_forward.1} parent=1 // pred_check_branch
      %62 = sbr.rel (0) target = $region25
    $region24: #{model2_forward.1} parent=1 // pred_region
      %s64 = ssub.s32 12288, 12288
      %65 = vsyncadd [#allocation9], %s64
      %s66 = sshll.u32 [#allocation8], 4
      %s67 = int_to_ptr.vmem [resolvable:$true] %s66
      %72 = dma.hbm_to_vmem [thread:$0]  %s5, 12288, %s67, [#allocation9], 128, 128, 8
    $region25: #{model2_forward.1} parent=1 // pred_fallthru
      _
    // Predicated region
    $region26: #{model2_forward.1} parent=1 // pred_check
      _
    $region27: #{model2_forward.1} parent=1 // pred_check_branch
      %74 = sbr.rel (0) target = $region29
    $region28: #{model2_forward.1} parent=1 // pred_region
      _
    $region29: #{model2_forward.1} parent=1 // pred_fallthru
      _
    // Predicated region
    $region30: #{model2_forward.1} parent=1 // pred_check
      _
    $region31: #{model2_forward.1} parent=1 // pred_check_branch
      %76 = sbr.rel (0) target = $region33
    $region32: #{model2_forward.1} parent=1 // pred_region
      %s78 = ssub.s32 6144, 6144
      %79 = vsyncadd [#allocation9], %s78
      %s80 = sshll.u32 [#allocation10], 4
      %s81 = int_to_ptr.vmem [resolvable:$true] %s80
      %86 = dma.hbm_to_vmem [thread:$0]  %s7, 6144, %s81, [#allocation9], 64, 64, 4
    $region33: #{model2_forward.1} parent=1 // pred_fallthru
      _
    // Predicated region
    $region34: #{model2_forward.1} parent=1 // pred_check
      _
    $region35: #{model2_forward.1} parent=1 // pred_check_branch
      %88 = sbr.rel (0) target = $region37
    $region36: #{model2_forward.1} parent=1 // pred_region
      _
    $region37: #{model2_forward.1} parent=1 // pred_fallthru
      _
    // Predicated region
    $region38: #{model2_forward.1} parent=1 // pred_check
      _
    $region39: #{model2_forward.1} parent=1 // pred_check_branch
      %90 = sbr.rel (0) target = $region41
    $region40: #{model2_forward.1} parent=1 // pred_region
      %s92 = ssub.s32 1024, 1024
      %93 = vsyncadd [#allocation12], %s92
      %s94 = sshll.u32 [#allocation11], 4
      %s95 = int_to_ptr.vmem [resolvable:$true] %s94
      %100 = dma.hbm_to_vmem [thread:$0]  %s9, 1024, %s95, [#allocation12], 64, 64, 4
    $region41: #{model2_forward.1} parent=1 // pred_fallthru
      _
    // Predicated region
    $region42: #{model2_forward.1} parent=1 // pred_check
      _
    $region43: #{model2_forward.1} parent=1 // pred_check_branch
      %102 = sbr.rel (0) target = $region45
    $region44: #{model2_forward.1} parent=1 // pred_region
      _
    $region45: #{model2_forward.1} parent=1 // pred_fallthru
      _
    // Predicated region
    $region46: #{model2_forward.1} parent=1 // pred_check
      _
    $region47: #{model2_forward.1} parent=1 // pred_check_branch
      %104 = sbr.rel (0) target = $region49
    $region48: #{model2_forward.1} parent=1 // pred_region
      %s106 = ssub.s32 1024, 1024
      %107 = vsyncadd [#allocation12], %s106
      %s108 = sshll.u32 [#allocation13], 4
      %s109 = int_to_ptr.vmem [resolvable:$true] %s108
      %114 = dma.hbm_to_vmem [thread:$0]  %s11, 1024, %s109, [#allocation12], 64, 64, 4
    $region49: #{model2_forward.1} parent=1 // pred_fallthru
      _
    // Predicated region
    $region50: #{model2_forward.1} parent=1 // pred_check
      _
    $region51: #{model2_forward.1} parent=1 // pred_check_branch
      %116 = sbr.rel (0) target = $region53
    $region52: #{model2_forward.1} parent=1 // pred_region
      _
    $region53: #{model2_forward.1} parent=1 // pred_fallthru
      _
    // Predicated region
    $region54: #{model2_forward.1} parent=1 // pred_check
      _
    $region55: #{model2_forward.1} parent=1 // pred_check_branch
      %118 = sbr.rel (0) target = $region57
    $region56: #{model2_forward.1} parent=1 // pred_region
      %119 = dma.done [#allocation3], 3072
    $region57: #{model2_forward.1} parent=1 // pred_fallthru
      _
    // Predicated region
    $region58: #{model2_forward.1} parent=1 // pred_check
      _
    $region59: #{model2_forward.1} parent=1 // pred_check_branch
      %121 = sbr.rel (0) target = $region61
    $region60: #{model2_forward.1} parent=1 // pred_region
      %122 = dma.done [#allocation6], 16
    $region61: #{model2_forward.1} parent=1 // pred_fallthru
      _
    // Predicated region
    $region62: #{model2_forward.1} parent=1 // pred_check
      _
    $region63: #{model2_forward.1} parent=1 // pred_check_branch
      %124 = sbr.rel (0) target = $region65
    $region64: #{model2_forward.1} parent=1 // pred_region
      %125 = dma.done [#allocation6], 6144
    $region65: #{model2_forward.1} parent=1 // pred_fallthru
      _
    // Predicated region
    $region66: #{model2_forward.1} parent=1 // pred_check
      _
    $region67: #{model2_forward.1} parent=1 // pred_check_branch
      %127 = sbr.rel (0) target = $region69
    $region68: #{model2_forward.1} parent=1 // pred_region
      %128 = dma.done [#allocation9], 12288
    $region69: #{model2_forward.1} parent=1 // pred_fallthru
      _
    // Predicated region
    $region70: #{model2_forward.1} parent=1 // pred_check
      _
    $region71: #{model2_forward.1} parent=1 // pred_check_branch
      %130 = sbr.rel (0) target = $region73
    $region72: #{model2_forward.1} parent=1 // pred_region
      %131 = dma.done [#allocation9], 6144
    $region73: #{model2_forward.1} parent=1 // pred_fallthru
      _
    // Predicated region
    $region74: #{model2_forward.1} parent=1 // pred_check
      _
    $region75: #{model2_forward.1} parent=1 // pred_check_branch
      %133 = sbr.rel (0) target = $region77
    $region76: #{model2_forward.1} parent=1 // pred_region
      %134 = dma.done [#allocation12], 1024
    $region77: #{model2_forward.1} parent=1 // pred_fallthru
      _
    // Predicated region
    $region78: #{model2_forward.1} parent=1 // pred_check
      _
    $region79: #{model2_forward.1} parent=1 // pred_check_branch
      %136 = sbr.rel (0) target = $region81
    $region80: #{model2_forward.1} parent=1 // pred_region
      %137 = dma.done [#allocation12], 1024
    $region81: #{model2_forward.1} parent=1 // pred_fallthru
      _
    %v139 = vld [vmem:[%s0] sm:$0xff]
    %v140 = vld [vmem:[%s0 + $0x8] sm:$0xff]
    %v141 = vld [vmem:[%s0 + $0x10] sm:$0xff]
    %v142 = vld [vmem:[%s0 + $0x18] sm:$0xff]
    %v143 = vrot.slane %v139, 7
    %v144 = vrot.slane %v141, 7
    %v145 = vrot.slane %v140, 7
    %v146 = vrot.slane %v142, 7
    %v147 = vlaneseq
    %v148 = vshrl.u32 %v147, 7
    %vm149 = vcmp.lt.s32.totalorder %v148, 1
    %v150 = vsel %vm149, %v143, %v145
    %v151 = vsel %vm149, %v144, %v146
    %v152 = vsel %vm149, %v145, %v143
    %v153 = vsel %vm149, %v146, %v144
    %v154 = vrot.slane %v139, 1
    %v155 = vrot.slane %v141, 1
    %v156 = vrot.slane %v140, 1
    %v157 = vrot.slane %v142, 1
    %vm158 = vcmp.lt.s32.totalorder %v148, 7
    %v159 = vsel %vm158, %v154, %v156
    %v160 = vsel %vm158, %v155, %v157
    %v161 = vsel %vm158, %v156, %v154
    %v162 = vsel %vm158, %v157, %v155
    %v163 = vpack.c.bf16 %v150, %v152
    %v164 = vpack.c.bf16 %v151, %v153
    %v165 = vld [vmem:[#allocation2] sm:$0xf]
    %v166 = vld [vmem:[#allocation2 + $0x4] sm:$0xf]
    %v167 = vld [vmem:[#allocation2 + $0x8] sm:$0xf]
    %v168 = vld [vmem:[#allocation2 + $0xc] sm:$0xf]
    %v169 = vld [vmem:[#allocation2 + $0x10] sm:$0xf]
    %v170 = vld [vmem:[#allocation2 + $0x14] sm:$0xf]
    %v171 = vld [vmem:[#allocation2 + $0x18] sm:$0xf]
    %v172 = vld [vmem:[#allocation2 + $0x1c] sm:$0xf]
    %v173 = vld [vmem:[#allocation2 + $0x20] sm:$0xf]
    %v174 = vld [vmem:[#allocation2 + $0x24] sm:$0xf]
    %v175 = vld [vmem:[#allocation2 + $0x28] sm:$0xf]
    %v176 = vld [vmem:[#allocation2 + $0x2c] sm:$0xf]
    %v177 = vld [vmem:[#allocation2 + $0x30] sm:$0xf]
    %v178 = vld [vmem:[#allocation2 + $0x34] sm:$0xf]
    %v179 = vld [vmem:[#allocation2 + $0x38] sm:$0xf]
    %v180 = vld [vmem:[#allocation2 + $0x3c] sm:$0xf]
    %v181 = vpack.c.bf16 %v140, %v139
    %v182 = vpack.c.bf16 %v142, %v141
    %v183 = vld [vmem:[#allocation2 + $0x40] sm:$0xf]
    %v184 = vld [vmem:[#allocation2 + $0x44] sm:$0xf]
    %v185 = vld [vmem:[#allocation2 + $0x48] sm:$0xf]
    %v186 = vld [vmem:[#allocation2 + $0x4c] sm:$0xf]
    %v187 = vld [vmem:[#allocation2 + $0x50] sm:$0xf]
    %v188 = vld [vmem:[#allocation2 + $0x54] sm:$0xf]
    %v189 = vld [vmem:[#allocation2 + $0x58] sm:$0xf]
    %v190 = vld [vmem:[#allocation2 + $0x5c] sm:$0xf]
    %v191 = vld [vmem:[#allocation2 + $0x60] sm:$0xf]
    %v192 = vld [vmem:[#allocation2 + $0x64] sm:$0xf]
    %v193 = vld [vmem:[#allocation2 + $0x68] sm:$0xf]
    %v194 = vld [vmem:[#allocation2 + $0x6c] sm:$0xf]
    %v195 = vld [vmem:[#allocation2 + $0x70] sm:$0xf]
    %v196 = vld [vmem:[#allocation2 + $0x74] sm:$0xf]
    %v197 = vld [vmem:[#allocation2 + $0x78] sm:$0xf]
    %v198 = vld [vmem:[#allocation2 + $0x7c] sm:$0xf]
    %v215 = vunpack.c.l.b16 %v183
    %v216 = vunpack.c.l.b16 %v184
    %v217 = vunpack.c.l.b16 %v185
    %v218 = vunpack.c.l.b16 %v186
    %v219 = vunpack.c.l.b16 %v187
    %v220 = vunpack.c.l.b16 %v188
    %v221 = vunpack.c.l.b16 %v189
    %v222 = vunpack.c.l.b16 %v190
    %v223 = vunpack.c.l.b16 %v191
    %v224 = vunpack.c.l.b16 %v192
    %v225 = vunpack.c.l.b16 %v193
    %v226 = vunpack.c.l.b16 %v194
    %v227 = vunpack.c.l.b16 %v195
    %v228 = vunpack.c.l.b16 %v196
    %v229 = vunpack.c.l.b16 %v197
    %v230 = vunpack.c.l.b16 %v198
    %v231 = vpack.c.b16 %v216, %v215
    %v232 = vpack.c.b16 %v218, %v217
    %v233 = vpack.c.b16 %v220, %v219
    %v234 = vpack.c.b16 %v222, %v221
    %v235 = vpack.c.b16 %v224, %v223
    %v236 = vpack.c.b16 %v226, %v225
    %v237 = vpack.c.b16 %v228, %v227
    %v238 = vpack.c.b16 %v230, %v229
    %247 = vmatprep.subr.bf16.mxu0 0
    %248 = vmatpush1.bf16.msra.mxu0 %v231
    %249 = vmatprep.subr.bf16.mxu0 0
    %250 = vmatpush1.bf16.msra.mxu0 %v232
    %251 = vmatprep.subr.bf16.mxu0 0
    %252 = vmatpush1.bf16.msra.mxu0 %v233
    %253 = vmatprep.subr.bf16.mxu0 0
    %254 = vmatpush1.bf16.msra.mxu0 %v234
    %255 = vmatprep.subr.bf16.mxu0 0
    %256 = vmatpush1.bf16.msra.mxu0 %v235
    %257 = vmatprep.subr.bf16.mxu0 0
    %258 = vmatpush1.bf16.msra.mxu0 %v236
    %259 = vmatprep.subr.bf16.mxu0 0
    %260 = vmatpush1.bf16.msra.mxu0 %v237
    %261 = vmatprep.subr.bf16.mxu0 0
    %262 = vmatpush1.bf16.msra.mxu0 %v238
    %263 = vmatprep.subr.bf16.mxu0 0
    %264 = vmatpush1.bf16.msra.mxu0 0
    %265 = vmatprep.subr.bf16.mxu0 0
    %266 = vmatpush1.bf16.msra.mxu0 0
    %267 = vmatprep.subr.bf16.mxu0 0
    %268 = vmatpush1.bf16.msra.mxu0 0
    %269 = vmatprep.subr.bf16.mxu0 0
    %270 = vmatpush1.bf16.msra.mxu0 0
    %271 = vmatprep.subr.bf16.mxu0 0
    %272 = vmatpush1.bf16.msra.mxu0 0
    %273 = vmatprep.subr.bf16.mxu0 0
    %274 = vmatpush1.bf16.msra.mxu0 0
    %275 = vmatprep.subr.bf16.mxu0 0
    %276 = vmatpush1.bf16.msra.mxu0 0
    %277 = vmatprep.subr.bf16.mxu0 0
    %278 = vmatpush1.bf16.msra.mxu0 0
    %279 = vmatprep.mubr.bf16.mxu0 0
    %280 = vmatmul.mubr.bf16.gmra.mrb[0].mxu0 %v181
    %v281 = vpop.f32.mrb[0].mxu0
    %v282 = vadd.f32 0.0, %v281
    %v283 = vpop.f32.mrb[0].mxu0
    %v284 = vpop.f32.mrb[0].mxu0
    %v285 = vadd.f32 0.0, %v284
    %v286 = vpop.f32.mrb[0].mxu0
    %287 = vmatprep.mubr.bf16.mxu0 0
    %288 = vmatmul.mubr.bf16.gmra.mrb[0].mxu0 %v182
    %v289 = vpop.f32.mrb[0].mxu0
    %v290 = vadd.f32 0.0, %v289
    %v291 = vpop.f32.mrb[0].mxu0
    %v292 = vpop.f32.mrb[0].mxu0
    %v293 = vadd.f32 0.0, %v292
    %v294 = vpop.f32.mrb[0].mxu0
    %295 = vdwg.mxu0
    %v312 = vunpack.c.l.b16 %v165
    %v313 = vunpack.c.l.b16 %v166
    %v314 = vunpack.c.l.b16 %v167
    %v315 = vunpack.c.l.b16 %v168
    %v316 = vunpack.c.l.b16 %v169
    %v317 = vunpack.c.l.b16 %v170
    %v318 = vunpack.c.l.b16 %v171
    %v319 = vunpack.c.l.b16 %v172
    %v320 = vunpack.c.l.b16 %v173
    %v321 = vunpack.c.l.b16 %v174
    %v322 = vunpack.c.l.b16 %v175
    %v323 = vunpack.c.l.b16 %v176
    %v324 = vunpack.c.l.b16 %v177
    %v325 = vunpack.c.l.b16 %v178
    %v326 = vunpack.c.l.b16 %v179
    %v327 = vunpack.c.l.b16 %v180
    %v328 = vpack.c.b16 %v313, %v312
    %v329 = vpack.c.b16 %v315, %v314
    %v330 = vpack.c.b16 %v317, %v316
    %v331 = vpack.c.b16 %v319, %v318
    %v332 = vpack.c.b16 %v321, %v320
    %v333 = vpack.c.b16 %v323, %v322
    %v334 = vpack.c.b16 %v325, %v324
    %v335 = vpack.c.b16 %v327, %v326
    %344 = vmatprep.subr.bf16.mxu0 0
    %345 = vmatpush1.bf16.msra.mxu0 %v328
    %346 = vmatprep.subr.bf16.mxu0 0
    %347 = vmatpush1.bf16.msra.mxu0 %v329
    %348 = vmatprep.subr.bf16.mxu0 0
    %349 = vmatpush1.bf16.msra.mxu0 %v330
    %350 = vmatprep.subr.bf16.mxu0 0
    %351 = vmatpush1.bf16.msra.mxu0 %v331
    %352 = vmatprep.subr.bf16.mxu0 0
    %353 = vmatpush1.bf16.msra.mxu0 %v332
    %354 = vmatprep.subr.bf16.mxu0 0
    %355 = vmatpush1.bf16.msra.mxu0 %v333
    %356 = vmatprep.subr.bf16.mxu0 0
    %357 = vmatpush1.bf16.msra.mxu0 %v334
    %358 = vmatprep.subr.bf16.mxu0 0
    %359 = vmatpush1.bf16.msra.mxu0 %v335
    %360 = vmatprep.subr.bf16.mxu0 0
    %361 = vmatpush1.bf16.msra.mxu0 0
    %362 = vmatprep.subr.bf16.mxu0 0
    %363 = vmatpush1.bf16.msra.mxu0 0
    %364 = vmatprep.subr.bf16.mxu0 0
    %365 = vmatpush1.bf16.msra.mxu0 0
    %366 = vmatprep.subr.bf16.mxu0 0
    %367 = vmatpush1.bf16.msra.mxu0 0
    %368 = vmatprep.subr.bf16.mxu0 0
    %369 = vmatpush1.bf16.msra.mxu0 0
    %370 = vmatprep.subr.bf16.mxu0 0
    %371 = vmatpush1.bf16.msra.mxu0 0
    %372 = vmatprep.subr.bf16.mxu0 0
    %373 = vmatpush1.bf16.msra.mxu0 0
    %374 = vmatprep.subr.bf16.mxu0 0
    %375 = vmatpush1.bf16.msra.mxu0 0
    %376 = vmatprep.mubr.bf16.mxu0 0
    %377 = vmatmul.mubr.bf16.gmra.mrb[0].mxu0 %v163
    %v378 = vpop.f32.mrb[0].mxu0
    %v379 = vadd.f32 %v282, %v378
    %v380 = vpop.f32.mrb[0].mxu0
    %v381 = vpop.f32.mrb[0].mxu0
    %v382 = vadd.f32 %v285, %v381
    %v383 = vpop.f32.mrb[0].mxu0
    %384 = vmatprep.mubr.bf16.mxu0 0
    %385 = vmatmul.mubr.bf16.gmra.mrb[0].mxu0 %v164
    %v386 = vpop.f32.mrb[0].mxu0
    %v387 = vadd.f32 %v290, %v386
    %v388 = vpop.f32.mrb[0].mxu0
    %v389 = vpop.f32.mrb[0].mxu0
    %v390 = vadd.f32 %v293, %v389
    %v391 = vpop.f32.mrb[0].mxu0
    %392 = vdwg.mxu0
    %v393 = vpack.c.bf16 %v161, %v159
    %v394 = vpack.c.bf16 %v162, %v160
    %v395 = vld [vmem:[#allocation2 + $0x80] sm:$0xf]
    %v396 = vld [vmem:[#allocation2 + $0x84] sm:$0xf]
    %v397 = vld [vmem:[#allocation2 + $0x88] sm:$0xf]
    %v398 = vld [vmem:[#allocation2 + $0x8c] sm:$0xf]
    %v399 = vld [vmem:[#allocation2 + $0x90] sm:$0xf]
    %v400 = vld [vmem:[#allocation2 + $0x94] sm:$0xf]
    %v401 = vld [vmem:[#allocation2 + $0x98] sm:$0xf]
    %v402 = vld [vmem:[#allocation2 + $0x9c] sm:$0xf]
    %v403 = vld [vmem:[#allocation2 + $0xa0] sm:$0xf]
    %v404 = vld [vmem:[#allocation2 + $0xa4] sm:$0xf]
    %v405 = vld [vmem:[#allocation2 + $0xa8] sm:$0xf]
    %v406 = vld [vmem:[#allocation2 + $0xac] sm:$0xf]
    %v407 = vld [vmem:[#allocation2 + $0xb0] sm:$0xf]
    %v408 = vld [vmem:[#allocation2 + $0xb4] sm:$0xf]
    %v409 = vld [vmem:[#allocation2 + $0xb8] sm:$0xf]
    %v410 = vld [vmem:[#allocation2 + $0xbc] sm:$0xf]
    %v427 = vunpack.c.l.b16 %v395
    %v428 = vunpack.c.l.b16 %v396
    %v429 = vunpack.c.l.b16 %v397
    %v430 = vunpack.c.l.b16 %v398
    %v431 = vunpack.c.l.b16 %v399
    %v432 = vunpack.c.l.b16 %v400
    %v433 = vunpack.c.l.b16 %v401
    %v434 = vunpack.c.l.b16 %v402
    %v435 = vunpack.c.l.b16 %v403
    %v436 = vunpack.c.l.b16 %v404
    %v437 = vunpack.c.l.b16 %v405
    %v438 = vunpack.c.l.b16 %v406
    %v439 = vunpack.c.l.b16 %v407
    %v440 = vunpack.c.l.b16 %v408
    %v441 = vunpack.c.l.b16 %v409
    %v442 = vunpack.c.l.b16 %v410
    %v443 = vpack.c.b16 %v428, %v427
    %v444 = vpack.c.b16 %v430, %v429
    %v445 = vpack.c.b16 %v432, %v431
    %v446 = vpack.c.b16 %v434, %v433
    %v447 = vpack.c.b16 %v436, %v435
    %v448 = vpack.c.b16 %v438, %v437
    %v449 = vpack.c.b16 %v440, %v439
    %v450 = vpack.c.b16 %v442, %v441
    %459 = vmatprep.subr.bf16.mxu0 0
    %460 = vmatpush1.bf16.msra.mxu0 %v443
    %461 = vmatprep.subr.bf16.mxu0 0
    %462 = vmatpush1.bf16.msra.mxu0 %v444
    %463 = vmatprep.subr.bf16.mxu0 0
    %464 = vmatpush1.bf16.msra.mxu0 %v445
    %465 = vmatprep.subr.bf16.mxu0 0
    %466 = vmatpush1.bf16.msra.mxu0 %v446
    %467 = vmatprep.subr.bf16.mxu0 0
    %468 = vmatpush1.bf16.msra.mxu0 %v447
    %469 = vmatprep.subr.bf16.mxu0 0
    %470 = vmatpush1.bf16.msra.mxu0 %v448
    %471 = vmatprep.subr.bf16.mxu0 0
    %472 = vmatpush1.bf16.msra.mxu0 %v449
    %473 = vmatprep.subr.bf16.mxu0 0
    %474 = vmatpush1.bf16.msra.mxu0 %v450
    %475 = vmatprep.subr.bf16.mxu0 0
    %476 = vmatpush1.bf16.msra.mxu0 0
    %477 = vmatprep.subr.bf16.mxu0 0
    %478 = vmatpush1.bf16.msra.mxu0 0
    %479 = vmatprep.subr.bf16.mxu0 0
    %480 = vmatpush1.bf16.msra.mxu0 0
    %481 = vmatprep.subr.bf16.mxu0 0
    %482 = vmatpush1.bf16.msra.mxu0 0
    %483 = vmatprep.subr.bf16.mxu0 0
    %484 = vmatpush1.bf16.msra.mxu0 0
    %485 = vmatprep.subr.bf16.mxu0 0
    %486 = vmatpush1.bf16.msra.mxu0 0
    %487 = vmatprep.subr.bf16.mxu0 0
    %488 = vmatpush1.bf16.msra.mxu0 0
    %489 = vmatprep.subr.bf16.mxu0 0
    %490 = vmatpush1.bf16.msra.mxu0 0
    %491 = vmatprep.mubr.bf16.mxu0 0
    %492 = vmatmul.mubr.bf16.gmra.mrb[0].mxu0 %v393
    %v493 = vpop.f32.mrb[0].mxu0
    %v494 = vadd.f32 0.0, %v493
    %v495 = vpop.f32.mrb[0].mxu0
    %v496 = vpop.f32.mrb[0].mxu0
    %v497 = vadd.f32 0.0, %v496
    %v498 = vpop.f32.mrb[0].mxu0
    %499 = vmatprep.mubr.bf16.mxu0 0
    %500 = vmatmul.mubr.bf16.gmra.mrb[0].mxu0 %v394
    %v501 = vpop.f32.mrb[0].mxu0
    %v502 = vadd.f32 0.0, %v501
    %v503 = vpop.f32.mrb[0].mxu0
    %v504 = vpop.f32.mrb[0].mxu0
    %v505 = vadd.f32 0.0, %v504
    %v506 = vpop.f32.mrb[0].mxu0
    %507 = vdwg.mxu0
    %v508 = vadd.f32 %v379, %v494
    %v509 = vadd.f32 %v382, %v497
    %v510 = vadd.f32 %v387, %v502
    %v511 = vadd.f32 %v390, %v505
    %v512 = vld [vmem:[#allocation5] sm:$0x1]
    %v514 = vlaneseq
    %v515 = vshrl.u32 %v514, 7
    %v516 = vsub.s32 0, %v515
    %v517 = vrot.slane %v512, %v516
    %v519 = vadd.f32 %v508, %v517
    %v520 = vadd.f32 %v509, %v517
    %v521 = vadd.f32 %v510, %v517
    %v522 = vadd.f32 %v511, %v517
    %v523 = vmax.f32 %v519, 0.0
    %v524 = vmax.f32 %v520, 0.0
    %v525 = vmax.f32 %v521, 0.0
    %v526 = vmax.f32 %v522, 0.0
    %v527 = vrot.slane %v523, 7
    %v528 = vrot.slane %v525, 7
    %v529 = vrot.slane %v524, 7
    %v530 = vrot.slane %v526, 7
    %v531 = vsel %vm149, %v527, %v529
    %v532 = vsel %vm149, %v528, %v530
    %v533 = vsel %vm149, %v529, %v527
    %v534 = vsel %vm149, %v530, %v528
    %v535 = vrot.slane %v523, 1
    %v536 = vrot.slane %v525, 1
    %v537 = vrot.slane %v524, 1
    %v538 = vrot.slane %v526, 1
    %v539 = vsel %vm158, %v535, %v537
    %v540 = vsel %vm158, %v536, %v538
    %v541 = vsel %vm158, %v537, %v535
    %v542 = vsel %vm158, %v538, %v536
    %v543 = vpack.c.bf16 %v531, %v533
    %v544 = vpack.c.bf16 %v532, %v534
    %v545 = vld [vmem:[#allocation7] sm:$0xff]
    %v546 = vld [vmem:[#allocation7 + $0x8] sm:$0xff]
    %v547 = vld [vmem:[#allocation7 + $0x10] sm:$0xff]
    %v548 = vld [vmem:[#allocation7 + $0x18] sm:$0xff]
    %v549 = vld [vmem:[#allocation7 + $0x20] sm:$0xff]
    %v550 = vld [vmem:[#allocation7 + $0x28] sm:$0xff]
    %v551 = vld [vmem:[#allocation7 + $0x30] sm:$0xff]
    %v552 = vld [vmem:[#allocation7 + $0x38] sm:$0xff]
    %v553 = vld [vmem:[#allocation7 + $0x40] sm:$0xff]
    %v554 = vld [vmem:[#allocation7 + $0x48] sm:$0xff]
    %v555 = vld [vmem:[#allocation7 + $0x50] sm:$0xff]
    %v556 = vld [vmem:[#allocation7 + $0x58] sm:$0xff]
    %v557 = vld [vmem:[#allocation7 + $0x60] sm:$0xff]
    %v558 = vld [vmem:[#allocation7 + $0x68] sm:$0xff]
    %v559 = vld [vmem:[#allocation7 + $0x70] sm:$0xff]
    %v560 = vld [vmem:[#allocation7 + $0x78] sm:$0xff]
    %v561 = vpack.c.bf16 %v524, %v523
    %v562 = vpack.c.bf16 %v526, %v525
    %v563 = vld [vmem:[#allocation7 + $0x80] sm:$0xff]
    %v564 = vld [vmem:[#allocation7 + $0x88] sm:$0xff]
    %v565 = vld [vmem:[#allocation7 + $0x90] sm:$0xff]
    %v566 = vld [vmem:[#allocation7 + $0x98] sm:$0xff]
    %v567 = vld [vmem:[#allocation7 + $0xa0] sm:$0xff]
    %v568 = vld [vmem:[#allocation7 + $0xa8] sm:$0xff]
    %v569 = vld [vmem:[#allocation7 + $0xb0] sm:$0xff]
    %v570 = vld [vmem:[#allocation7 + $0xb8] sm:$0xff]
    %v571 = vld [vmem:[#allocation7 + $0xc0] sm:$0xff]
    %v572 = vld [vmem:[#allocation7 + $0xc8] sm:$0xff]
    %v573 = vld [vmem:[#allocation7 + $0xd0] sm:$0xff]
    %v574 = vld [vmem:[#allocation7 + $0xd8] sm:$0xff]
    %v575 = vld [vmem:[#allocation7 + $0xe0] sm:$0xff]
    %v576 = vld [vmem:[#allocation7 + $0xe8] sm:$0xff]
    %v577 = vld [vmem:[#allocation7 + $0xf0] sm:$0xff]
    %v578 = vld [vmem:[#allocation7 + $0xf8] sm:$0xff]
    %v595 = vunpack.c.l.b16 %v563
    %v596 = vunpack.c.h.b16 %v563
    %v597 = vunpack.c.l.b16 %v564
    %v598 = vunpack.c.h.b16 %v564
    %v599 = vunpack.c.l.b16 %v565
    %v600 = vunpack.c.h.b16 %v565
    %v601 = vunpack.c.l.b16 %v566
    %v602 = vunpack.c.h.b16 %v566
    %v603 = vunpack.c.l.b16 %v567
    %v604 = vunpack.c.h.b16 %v567
    %v605 = vunpack.c.l.b16 %v568
    %v606 = vunpack.c.h.b16 %v568
    %v607 = vunpack.c.l.b16 %v569
    %v608 = vunpack.c.h.b16 %v569
    %v609 = vunpack.c.l.b16 %v570
    %v610 = vunpack.c.h.b16 %v570
    %v611 = vunpack.c.l.b16 %v571
    %v612 = vunpack.c.h.b16 %v571
    %v613 = vunpack.c.l.b16 %v572
    %v614 = vunpack.c.h.b16 %v572
    %v615 = vunpack.c.l.b16 %v573
    %v616 = vunpack.c.h.b16 %v573
    %v617 = vunpack.c.l.b16 %v574
    %v618 = vunpack.c.h.b16 %v574
    %v619 = vunpack.c.l.b16 %v575
    %v620 = vunpack.c.h.b16 %v575
    %v621 = vunpack.c.l.b16 %v576
    %v622 = vunpack.c.h.b16 %v576
    %v623 = vunpack.c.l.b16 %v577
    %v624 = vunpack.c.h.b16 %v577
    %v625 = vunpack.c.l.b16 %v578
    %v626 = vunpack.c.h.b16 %v578
    %v627 = vpack.c.b16 %v597, %v595
    %v628 = vpack.c.b16 %v598, %v596
    %v629 = vpack.c.b16 %v601, %v599
    %v630 = vpack.c.b16 %v602, %v600
    %v631 = vpack.c.b16 %v605, %v603
    %v632 = vpack.c.b16 %v606, %v604
    %v633 = vpack.c.b16 %v609, %v607
    %v634 = vpack.c.b16 %v610, %v608
    %v635 = vpack.c.b16 %v613, %v611
    %v636 = vpack.c.b16 %v614, %v612
    %v637 = vpack.c.b16 %v617, %v615
    %v638 = vpack.c.b16 %v618, %v616
    %v639 = vpack.c.b16 %v621, %v619
    %v640 = vpack.c.b16 %v622, %v620
    %v641 = vpack.c.b16 %v625, %v623
    %v642 = vpack.c.b16 %v626, %v624
    %659 = vmatprep.subr.bf16.mxu0 %v628
    %660 = vmatpush1.bf16.msra.mxu0 %v627
    %661 = vmatprep.subr.bf16.mxu0 %v630
    %662 = vmatpush1.bf16.msra.mxu0 %v629
    %663 = vmatprep.subr.bf16.mxu0 %v632
    %664 = vmatpush1.bf16.msra.mxu0 %v631
    %665 = vmatprep.subr.bf16.mxu0 %v634
    %666 = vmatpush1.bf16.msra.mxu0 %v633
    %667 = vmatprep.subr.bf16.mxu0 %v636
    %668 = vmatpush1.bf16.msra.mxu0 %v635
    %669 = vmatprep.subr.bf16.mxu0 %v638
    %670 = vmatpush1.bf16.msra.mxu0 %v637
    %671 = vmatprep.subr.bf16.mxu0 %v640
    %672 = vmatpush1.bf16.msra.mxu0 %v639
    %673 = vmatprep.subr.bf16.mxu0 %v642
    %674 = vmatpush1.bf16.msra.mxu0 %v641
    %675 = vmatprep.subr.bf16.mxu0 0
    %676 = vmatpush1.bf16.msra.mxu0 0
    %677 = vmatprep.subr.bf16.mxu0 0
    %678 = vmatpush1.bf16.msra.mxu0 0
    %679 = vmatprep.subr.bf16.mxu0 0
    %680 = vmatpush1.bf16.msra.mxu0 0
    %681 = vmatprep.subr.bf16.mxu0 0
    %682 = vmatpush1.bf16.msra.mxu0 0
    %683 = vmatprep.subr.bf16.mxu0 0
    %684 = vmatpush1.bf16.msra.mxu0 0
    %685 = vmatprep.subr.bf16.mxu0 0
    %686 = vmatpush1.bf16.msra.mxu0 0
    %687 = vmatprep.subr.bf16.mxu0 0
    %688 = vmatpush1.bf16.msra.mxu0 0
    %689 = vmatprep.subr.bf16.mxu0 0
    %690 = vmatpush1.bf16.msra.mxu0 0
    %691 = vmatprep.mubr.bf16.mxu0 0
    %692 = vmatmul.mubr.bf16.gmra.mrb[0].mxu0 %v561
    %v693 = vpop.f32.mrb[0].mxu0
    %v694 = vadd.f32 0.0, %v693
    %v695 = vpop.f32.mrb[0].mxu0
    %v696 = vadd.f32 0.0, %v695
    %v697 = vpop.f32.mrb[0].mxu0
    %v698 = vadd.f32 0.0, %v697
    %v699 = vpop.f32.mrb[0].mxu0
    %v700 = vadd.f32 0.0, %v699
    %701 = vmatprep.mubr.bf16.mxu0 0
    %702 = vmatmul.mubr.bf16.gmra.mrb[0].mxu0 %v562
    %v703 = vpop.f32.mrb[0].mxu0
    %v704 = vadd.f32 0.0, %v703
    %v705 = vpop.f32.mrb[0].mxu0
    %v706 = vadd.f32 0.0, %v705
    %v707 = vpop.f32.mrb[0].mxu0
    %v708 = vadd.f32 0.0, %v707
    %v709 = vpop.f32.mrb[0].mxu0
    %v710 = vadd.f32 0.0, %v709
    %711 = vdwg.mxu0
    %v728 = vunpack.c.l.b16 %v545
    %v729 = vunpack.c.h.b16 %v545
    %v730 = vunpack.c.l.b16 %v546
    %v731 = vunpack.c.h.b16 %v546
    %v732 = vunpack.c.l.b16 %v547
    %v733 = vunpack.c.h.b16 %v547
    %v734 = vunpack.c.l.b16 %v548
    %v735 = vunpack.c.h.b16 %v548
    %v736 = vunpack.c.l.b16 %v549
    %v737 = vunpack.c.h.b16 %v549
    %v738 = vunpack.c.l.b16 %v550
    %v739 = vunpack.c.h.b16 %v550
    %v740 = vunpack.c.l.b16 %v551
    %v741 = vunpack.c.h.b16 %v551
    %v742 = vunpack.c.l.b16 %v552
    %v743 = vunpack.c.h.b16 %v552
    %v744 = vunpack.c.l.b16 %v553
    %v745 = vunpack.c.h.b16 %v553
    %v746 = vunpack.c.l.b16 %v554
    %v747 = vunpack.c.h.b16 %v554
    %v748 = vunpack.c.l.b16 %v555
    %v749 = vunpack.c.h.b16 %v555
    %v750 = vunpack.c.l.b16 %v556
    %v751 = vunpack.c.h.b16 %v556
    %v752 = vunpack.c.l.b16 %v557
    %v753 = vunpack.c.h.b16 %v557
    %v754 = vunpack.c.l.b16 %v558
    %v755 = vunpack.c.h.b16 %v558
    %v756 = vunpack.c.l.b16 %v559
    %v757 = vunpack.c.h.b16 %v559
    %v758 = vunpack.c.l.b16 %v560
    %v759 = vunpack.c.h.b16 %v560
    %v760 = vpack.c.b16 %v730, %v728
    %v761 = vpack.c.b16 %v731, %v729
    %v762 = vpack.c.b16 %v734, %v732
    %v763 = vpack.c.b16 %v735, %v733
    %v764 = vpack.c.b16 %v738, %v736
    %v765 = vpack.c.b16 %v739, %v737
    %v766 = vpack.c.b16 %v742, %v740
    %v767 = vpack.c.b16 %v743, %v741
    %v768 = vpack.c.b16 %v746, %v744
    %v769 = vpack.c.b16 %v747, %v745
    %v770 = vpack.c.b16 %v750, %v748
    %v771 = vpack.c.b16 %v751, %v749
    %v772 = vpack.c.b16 %v754, %v752
    %v773 = vpack.c.b16 %v755, %v753
    %v774 = vpack.c.b16 %v758, %v756
    %v775 = vpack.c.b16 %v759, %v757
    %792 = vmatprep.subr.bf16.mxu0 %v761
    %793 = vmatpush1.bf16.msra.mxu0 %v760
    %794 = vmatprep.subr.bf16.mxu0 %v763
    %795 = vmatpush1.bf16.msra.mxu0 %v762
    %796 = vmatprep.subr.bf16.mxu0 %v765
    %797 = vmatpush1.bf16.msra.mxu0 %v764
    %798 = vmatprep.subr.bf16.mxu0 %v767
    %799 = vmatpush1.bf16.msra.mxu0 %v766
    %800 = vmatprep.subr.bf16.mxu0 %v769
    %801 = vmatpush1.bf16.msra.mxu0 %v768
    %802 = vmatprep.subr.bf16.mxu0 %v771
    %803 = vmatpush1.bf16.msra.mxu0 %v770
    %804 = vmatprep.subr.bf16.mxu0 %v773
    %805 = vmatpush1.bf16.msra.mxu0 %v772
    %806 = vmatprep.subr.bf16.mxu0 %v775
    %807 = vmatpush1.bf16.msra.mxu0 %v774
    %808 = vmatprep.subr.bf16.mxu0 0
    %809 = vmatpush1.bf16.msra.mxu0 0
    %810 = vmatprep.subr.bf16.mxu0 0
    %811 = vmatpush1.bf16.msra.mxu0 0
    %812 = vmatprep.subr.bf16.mxu0 0
    %813 = vmatpush1.bf16.msra.mxu0 0
    %814 = vmatprep.subr.bf16.mxu0 0
    %815 = vmatpush1.bf16.msra.mxu0 0
    %816 = vmatprep.subr.bf16.mxu0 0
    %817 = vmatpush1.bf16.msra.mxu0 0
    %818 = vmatprep.subr.bf16.mxu0 0
    %819 = vmatpush1.bf16.msra.mxu0 0
    %820 = vmatprep.subr.bf16.mxu0 0
    %821 = vmatpush1.bf16.msra.mxu0 0
    %822 = vmatprep.subr.bf16.mxu0 0
    %823 = vmatpush1.bf16.msra.mxu0 0
    %824 = vmatprep.mubr.bf16.mxu0 0
    %825 = vmatmul.mubr.bf16.gmra.mrb[0].mxu0 %v543
    %v826 = vpop.f32.mrb[0].mxu0
    %v827 = vadd.f32 %v694, %v826
    %v828 = vpop.f32.mrb[0].mxu0
    %v829 = vadd.f32 %v696, %v828
    %v830 = vpop.f32.mrb[0].mxu0
    %v831 = vadd.f32 %v698, %v830
    %v832 = vpop.f32.mrb[0].mxu0
    %v833 = vadd.f32 %v700, %v832
    %834 = vmatprep.mubr.bf16.mxu0 0
    %835 = vmatmul.mubr.bf16.gmra.mrb[0].mxu0 %v544
    %v836 = vpop.f32.mrb[0].mxu0
    %v837 = vadd.f32 %v704, %v836
    %v838 = vpop.f32.mrb[0].mxu0
    %v839 = vadd.f32 %v706, %v838
    %v840 = vpop.f32.mrb[0].mxu0
    %v841 = vadd.f32 %v708, %v840
    %v842 = vpop.f32.mrb[0].mxu0
    %v843 = vadd.f32 %v710, %v842
    %844 = vdwg.mxu0
    %v845 = vpack.c.bf16 %v541, %v539
    %v846 = vpack.c.bf16 %v542, %v540
    %v847 = vld [vmem:[#allocation7 + $0x100] sm:$0xff]
    %v848 = vld [vmem:[#allocation7 + $0x108] sm:$0xff]
    %v849 = vld [vmem:[#allocation7 + $0x110] sm:$0xff]
    %v850 = vld [vmem:[#allocation7 + $0x118] sm:$0xff]
    %v851 = vld [vmem:[#allocation7 + $0x120] sm:$0xff]
    %v852 = vld [vmem:[#allocation7 + $0x128] sm:$0xff]
    %v853 = vld [vmem:[#allocation7 + $0x130] sm:$0xff]
    %v854 = vld [vmem:[#allocation7 + $0x138] sm:$0xff]
    %v855 = vld [vmem:[#allocation7 + $0x140] sm:$0xff]
    %v856 = vld [vmem:[#allocation7 + $0x148] sm:$0xff]
    %v857 = vld [vmem:[#allocation7 + $0x150] sm:$0xff]
    %v858 = vld [vmem:[#allocation7 + $0x158] sm:$0xff]
    %v859 = vld [vmem:[#allocation7 + $0x160] sm:$0xff]
    %v860 = vld [vmem:[#allocation7 + $0x168] sm:$0xff]
    %v861 = vld [vmem:[#allocation7 + $0x170] sm:$0xff]
    %v862 = vld [vmem:[#allocation7 + $0x178] sm:$0xff]
    %v879 = vunpack.c.l.b16 %v847
    %v880 = vunpack.c.h.b16 %v847
    %v881 = vunpack.c.l.b16 %v848
    %v882 = vunpack.c.h.b16 %v848
    %v883 = vunpack.c.l.b16 %v849
    %v884 = vunpack.c.h.b16 %v849
    %v885 = vunpack.c.l.b16 %v850
    %v886 = vunpack.c.h.b16 %v850
    %v887 = vunpack.c.l.b16 %v851
    %v888 = vunpack.c.h.b16 %v851
    %v889 = vunpack.c.l.b16 %v852
    %v890 = vunpack.c.h.b16 %v852
    %v891 = vunpack.c.l.b16 %v853
    %v892 = vunpack.c.h.b16 %v853
    %v893 = vunpack.c.l.b16 %v854
    %v894 = vunpack.c.h.b16 %v854
    %v895 = vunpack.c.l.b16 %v855
    %v896 = vunpack.c.h.b16 %v855
    %v897 = vunpack.c.l.b16 %v856
    %v898 = vunpack.c.h.b16 %v856
    %v899 = vunpack.c.l.b16 %v857
    %v900 = vunpack.c.h.b16 %v857
    %v901 = vunpack.c.l.b16 %v858
    %v902 = vunpack.c.h.b16 %v858
    %v903 = vunpack.c.l.b16 %v859
    %v904 = vunpack.c.h.b16 %v859
    %v905 = vunpack.c.l.b16 %v860
    %v906 = vunpack.c.h.b16 %v860
    %v907 = vunpack.c.l.b16 %v861
    %v908 = vunpack.c.h.b16 %v861
    %v909 = vunpack.c.l.b16 %v862
    %v910 = vunpack.c.h.b16 %v862
    %v911 = vpack.c.b16 %v881, %v879
    %v912 = vpack.c.b16 %v882, %v880
    %v913 = vpack.c.b16 %v885, %v883
    %v914 = vpack.c.b16 %v886, %v884
    %v915 = vpack.c.b16 %v889, %v887
    %v916 = vpack.c.b16 %v890, %v888
    %v917 = vpack.c.b16 %v893, %v891
    %v918 = vpack.c.b16 %v894, %v892
    %v919 = vpack.c.b16 %v897, %v895
    %v920 = vpack.c.b16 %v898, %v896
    %v921 = vpack.c.b16 %v901, %v899
    %v922 = vpack.c.b16 %v902, %v900
    %v923 = vpack.c.b16 %v905, %v903
    %v924 = vpack.c.b16 %v906, %v904
    %v925 = vpack.c.b16 %v909, %v907
    %v926 = vpack.c.b16 %v910, %v908
    %943 = vmatprep.subr.bf16.mxu0 %v912
    %944 = vmatpush1.bf16.msra.mxu0 %v911
    %945 = vmatprep.subr.bf16.mxu0 %v914
    %946 = vmatpush1.bf16.msra.mxu0 %v913
    %947 = vmatprep.subr.bf16.mxu0 %v916
    %948 = vmatpush1.bf16.msra.mxu0 %v915
    %949 = vmatprep.subr.bf16.mxu0 %v918
    %950 = vmatpush1.bf16.msra.mxu0 %v917
    %951 = vmatprep.subr.bf16.mxu0 %v920
    %952 = vmatpush1.bf16.msra.mxu0 %v919
    %953 = vmatprep.subr.bf16.mxu0 %v922
    %954 = vmatpush1.bf16.msra.mxu0 %v921
    %955 = vmatprep.subr.bf16.mxu0 %v924
    %956 = vmatpush1.bf16.msra.mxu0 %v923
    %957 = vmatprep.subr.bf16.mxu0 %v926
    %958 = vmatpush1.bf16.msra.mxu0 %v925
    %959 = vmatprep.subr.bf16.mxu0 0
    %960 = vmatpush1.bf16.msra.mxu0 0
    %961 = vmatprep.subr.bf16.mxu0 0
    %962 = vmatpush1.bf16.msra.mxu0 0
    %963 = vmatprep.subr.bf16.mxu0 0
    %964 = vmatpush1.bf16.msra.mxu0 0
    %965 = vmatprep.subr.bf16.mxu0 0
    %966 = vmatpush1.bf16.msra.mxu0 0
    %967 = vmatprep.subr.bf16.mxu0 0
    %968 = vmatpush1.bf16.msra.mxu0 0
    %969 = vmatprep.subr.bf16.mxu0 0
    %970 = vmatpush1.bf16.msra.mxu0 0
    %971 = vmatprep.subr.bf16.mxu0 0
    %972 = vmatpush1.bf16.msra.mxu0 0
    %973 = vmatprep.subr.bf16.mxu0 0
    %974 = vmatpush1.bf16.msra.mxu0 0
    %975 = vmatprep.mubr.bf16.mxu0 0
    %976 = vmatmul.mubr.bf16.gmra.mrb[0].mxu0 %v845
    %v977 = vpop.f32.mrb[0].mxu0
    %v978 = vadd.f32 0.0, %v977
    %v979 = vpop.f32.mrb[0].mxu0
    %v980 = vadd.f32 0.0, %v979
    %v981 = vpop.f32.mrb[0].mxu0
    %v982 = vadd.f32 0.0, %v981
    %v983 = vpop.f32.mrb[0].mxu0
    %v984 = vadd.f32 0.0, %v983
    %985 = vmatprep.mubr.bf16.mxu0 0
    %986 = vmatmul.mubr.bf16.gmra.mrb[0].mxu0 %v846
    %v987 = vpop.f32.mrb[0].mxu0
    %v988 = vadd.f32 0.0, %v987
    %v989 = vpop.f32.mrb[0].mxu0
    %v990 = vadd.f32 0.0, %v989
    %v991 = vpop.f32.mrb[0].mxu0
    %v992 = vadd.f32 0.0, %v991
    %v993 = vpop.f32.mrb[0].mxu0
    %v994 = vadd.f32 0.0, %v993
    %995 = vdwg.mxu0
    %v996 = vadd.f32 %v827, %v978
    %v997 = vadd.f32 %v829, %v980
    %v998 = vadd.f32 %v831, %v982
    %v999 = vadd.f32 %v833, %v984
    %v1000 = vadd.f32 %v837, %v988
    %v1001 = vadd.f32 %v839, %v990
    %v1002 = vadd.f32 %v841, %v992
    %v1003 = vadd.f32 %v843, %v994
    %v1004 = vld [vmem:[%s4] sm:$0x3]
    %v1006 = vlaneseq
    %v1007 = vshrl.u32 %v1006, 7
    %v1008 = vsub.s32 0, %v1007
    %v1009 = vrot.slane %v1004, %v1008
    %v1010 = vlaneseq
    %v1011 = vshrl.u32 %v1010, 7
    %v1012 = vsub.s32 1, %v1011
    %v1013 = vrot.slane %v1004, %v1012
    %v1016 = vadd.f32 %v996, %v1009
    %v1017 = vadd.f32 %v997, %v1013
    %v1018 = vadd.f32 %v998, %v1009
    %v1019 = vadd.f32 %v999, %v1013
    %v1020 = vadd.f32 %v1000, %v1009
    %v1021 = vadd.f32 %v1001, %v1013
    %v1022 = vadd.f32 %v1002, %v1009
    %v1023 = vadd.f32 %v1003, %v1013
    %v1024 = vmax.f32 %v1016, 0.0
    %v1025 = vmax.f32 %v1017, 0.0
    %v1026 = vmax.f32 %v1018, 0.0
    %v1027 = vmax.f32 %v1019, 0.0
    %v1028 = vmax.f32 %v1020, 0.0
    %v1029 = vmax.f32 %v1021, 0.0
    %v1030 = vmax.f32 %v1022, 0.0
    %v1031 = vmax.f32 %v1023, 0.0
    %v1032 = vrot.slane %v1024, 7
    %v1033 = vrot.slane %v1025, 7
    %v1034 = vrot.slane %v1028, 7
    %v1035 = vrot.slane %v1029, 7
    %v1036 = vrot.slane %v1026, 7
    %v1037 = vrot.slane %v1027, 7
    %v1038 = vrot.slane %v1030, 7
    %v1039 = vrot.slane %v1031, 7
    %v1040 = vsel %vm149, %v1032, %v1036
    %v1041 = vsel %vm149, %v1033, %v1037
    %v1042 = vsel %vm149, %v1034, %v1038
    %v1043 = vsel %vm149, %v1035, %v1039
    %v1044 = vsel %vm149, %v1036, %v1032
    %v1045 = vsel %vm149, %v1037, %v1033
    %v1046 = vsel %vm149, %v1038, %v1034
    %v1047 = vsel %vm149, %v1039, %v1035
    %v1048 = vrot.slane %v1024, 1
    %v1049 = vrot.slane %v1025, 1
    %v1050 = vrot.slane %v1028, 1
    %v1051 = vrot.slane %v1029, 1
    %v1052 = vrot.slane %v1026, 1
    %v1053 = vrot.slane %v1027, 1
    %v1054 = vrot.slane %v1030, 1
    %v1055 = vrot.slane %v1031, 1
    %v1056 = vsel %vm158, %v1048, %v1052
    %v1057 = vsel %vm158, %v1049, %v1053
    %v1058 = vsel %vm158, %v1050, %v1054
    %v1059 = vsel %vm158, %v1051, %v1055
    %v1060 = vsel %vm158, %v1052, %v1048
    %v1061 = vsel %vm158, %v1053, %v1049
    %v1062 = vsel %vm158, %v1054, %v1050
    %v1063 = vsel %vm158, %v1055, %v1051
    %v1064 = vpack.c.bf16 %v1040, %v1044
    %v1065 = vpack.c.bf16 %v1041, %v1045
    %v1066 = vpack.c.bf16 %v1042, %v1046
    %v1067 = vpack.c.bf16 %v1043, %v1047
    %v1068 = vld [vmem:[#allocation8] sm:$0xff]
    %v1069 = vld [vmem:[#allocation8 + $0x8] sm:$0xff]
    %v1070 = vld [vmem:[#allocation8 + $0x10] sm:$0xff]
    %v1071 = vld [vmem:[#allocation8 + $0x18] sm:$0xff]
    %v1072 = vld [vmem:[#allocation8 + $0x20] sm:$0xff]
    %v1073 = vld [vmem:[#allocation8 + $0x28] sm:$0xff]
    %v1074 = vld [vmem:[#allocation8 + $0x30] sm:$0xff]
    %v1075 = vld [vmem:[#allocation8 + $0x38] sm:$0xff]
    %v1076 = vld [vmem:[#allocation8 + $0x40] sm:$0xff]
    %v1077 = vld [vmem:[#allocation8 + $0x48] sm:$0xff]
    %v1078 = vld [vmem:[#allocation8 + $0x50] sm:$0xff]
    %v1079 = vld [vmem:[#allocation8 + $0x58] sm:$0xff]
    %v1080 = vld [vmem:[#allocation8 + $0x60] sm:$0xff]
    %v1081 = vld [vmem:[#allocation8 + $0x68] sm:$0xff]
    %v1082 = vld [vmem:[#allocation8 + $0x70] sm:$0xff]
    %v1083 = vld [vmem:[#allocation8 + $0x78] sm:$0xff]
    %v1084 = vld [vmem:[#allocation8 + $0x80] sm:$0xff]
    %v1085 = vld [vmem:[#allocation8 + $0x88] sm:$0xff]
    %v1086 = vld [vmem:[#allocation8 + $0x90] sm:$0xff]
    %v1087 = vld [vmem:[#allocation8 + $0x98] sm:$0xff]
    %v1088 = vld [vmem:[#allocation8 + $0xa0] sm:$0xff]
    %v1089 = vld [vmem:[#allocation8 + $0xa8] sm:$0xff]
    %v1090 = vld [vmem:[#allocation8 + $0xb0] sm:$0xff]
    %v1091 = vld [vmem:[#allocation8 + $0xb8] sm:$0xff]
    %v1092 = vld [vmem:[#allocation8 + $0xc0] sm:$0xff]
    %v1093 = vld [vmem:[#allocation8 + $0xc8] sm:$0xff]
    %v1094 = vld [vmem:[#allocation8 + $0xd0] sm:$0xff]
    %v1095 = vld [vmem:[#allocation8 + $0xd8] sm:$0xff]
    %v1096 = vld [vmem:[#allocation8 + $0xe0] sm:$0xff]
    %v1097 = vld [vmem:[#allocation8 + $0xe8] sm:$0xff]
    %v1098 = vld [vmem:[#allocation8 + $0xf0] sm:$0xff]
    %v1099 = vld [vmem:[#allocation8 + $0xf8] sm:$0xff]
    %v1100 = vpack.c.bf16 %v1026, %v1024
    %v1101 = vpack.c.bf16 %v1027, %v1025
    %v1102 = vpack.c.bf16 %v1030, %v1028
    %v1103 = vpack.c.bf16 %v1031, %v1029
    %v1104 = vld [vmem:[#allocation8 + $0x100] sm:$0xff]
    %v1105 = vld [vmem:[#allocation8 + $0x108] sm:$0xff]
    %v1106 = vld [vmem:[#allocation8 + $0x110] sm:$0xff]
    %v1107 = vld [vmem:[#allocation8 + $0x118] sm:$0xff]
    %v1108 = vld [vmem:[#allocation8 + $0x120] sm:$0xff]
    %v1109 = vld [vmem:[#allocation8 + $0x128] sm:$0xff]
    %v1110 = vld [vmem:[#allocation8 + $0x130] sm:$0xff]
    %v1111 = vld [vmem:[#allocation8 + $0x138] sm:$0xff]
    %v1112 = vld [vmem:[#allocation8 + $0x140] sm:$0xff]
    %v1113 = vld [vmem:[#allocation8 + $0x148] sm:$0xff]
    %v1114 = vld [vmem:[#allocation8 + $0x150] sm:$0xff]
    %v1115 = vld [vmem:[#allocation8 + $0x158] sm:$0xff]
    %v1116 = vld [vmem:[#allocation8 + $0x160] sm:$0xff]
    %v1117 = vld [vmem:[#allocation8 + $0x168] sm:$0xff]
    %v1118 = vld [vmem:[#allocation8 + $0x170] sm:$0xff]
    %v1119 = vld [vmem:[#allocation8 + $0x178] sm:$0xff]
    %v1120 = vld [vmem:[#allocation8 + $0x180] sm:$0xff]
    %v1121 = vld [vmem:[#allocation8 + $0x188] sm:$0xff]
    %v1122 = vld [vmem:[#allocation8 + $0x190] sm:$0xff]
    %v1123 = vld [vmem:[#allocation8 + $0x198] sm:$0xff]
    %v1124 = vld [vmem:[#allocation8 + $0x1a0] sm:$0xff]
    %v1125 = vld [vmem:[#allocation8 + $0x1a8] sm:$0xff]
    %v1126 = vld [vmem:[#allocation8 + $0x1b0] sm:$0xff]
    %v1127 = vld [vmem:[#allocation8 + $0x1b8] sm:$0xff]
    %v1128 = vld [vmem:[#allocation8 + $0x1c0] sm:$0xff]
    %v1129 = vld [vmem:[#allocation8 + $0x1c8] sm:$0xff]
    %v1130 = vld [vmem:[#allocation8 + $0x1d0] sm:$0xff]
    %v1131 = vld [vmem:[#allocation8 + $0x1d8] sm:$0xff]
    %v1132 = vld [vmem:[#allocation8 + $0x1e0] sm:$0xff]
    %v1133 = vld [vmem:[#allocation8 + $0x1e8] sm:$0xff]
    %v1134 = vld [vmem:[#allocation8 + $0x1f0] sm:$0xff]
    %v1135 = vld [vmem:[#allocation8 + $0x1f8] sm:$0xff]
    %v1168 = vunpack.c.l.b16 %v1104
    %v1169 = vunpack.c.h.b16 %v1104
    %v1170 = vunpack.c.l.b16 %v1105
    %v1171 = vunpack.c.h.b16 %v1105
    %v1172 = vunpack.c.l.b16 %v1106
    %v1173 = vunpack.c.h.b16 %v1106
    %v1174 = vunpack.c.l.b16 %v1107
    %v1175 = vunpack.c.h.b16 %v1107
    %v1176 = vunpack.c.l.b16 %v1108
    %v1177 = vunpack.c.h.b16 %v1108
    %v1178 = vunpack.c.l.b16 %v1109
    %v1179 = vunpack.c.h.b16 %v1109
    %v1180 = vunpack.c.l.b16 %v1110
    %v1181 = vunpack.c.h.b16 %v1110
    %v1182 = vunpack.c.l.b16 %v1111
    %v1183 = vunpack.c.h.b16 %v1111
    %v1184 = vunpack.c.l.b16 %v1112
    %v1185 = vunpack.c.h.b16 %v1112
    %v1186 = vunpack.c.l.b16 %v1113
    %v1187 = vunpack.c.h.b16 %v1113
    %v1188 = vunpack.c.l.b16 %v1114
    %v1189 = vunpack.c.h.b16 %v1114
    %v1190 = vunpack.c.l.b16 %v1115
    %v1191 = vunpack.c.h.b16 %v1115
    %v1192 = vunpack.c.l.b16 %v1116
    %v1193 = vunpack.c.h.b16 %v1116
    %v1194 = vunpack.c.l.b16 %v1117
    %v1195 = vunpack.c.h.b16 %v1117
    %v1196 = vunpack.c.l.b16 %v1118
    %v1197 = vunpack.c.h.b16 %v1118
    %v1198 = vunpack.c.l.b16 %v1119
    %v1199 = vunpack.c.h.b16 %v1119
    %v1200 = vunpack.c.l.b16 %v1120
    %v1201 = vunpack.c.h.b16 %v1120
    %v1202 = vunpack.c.l.b16 %v1121
    %v1203 = vunpack.c.h.b16 %v1121
    %v1204 = vunpack.c.l.b16 %v1122
    %v1205 = vunpack.c.h.b16 %v1122
    %v1206 = vunpack.c.l.b16 %v1123
    %v1207 = vunpack.c.h.b16 %v1123
    %v1208 = vunpack.c.l.b16 %v1124
    %v1209 = vunpack.c.h.b16 %v1124
    %v1210 = vunpack.c.l.b16 %v1125
    %v1211 = vunpack.c.h.b16 %v1125
    %v1212 = vunpack.c.l.b16 %v1126
    %v1213 = vunpack.c.h.b16 %v1126
    %v1214 = vunpack.c.l.b16 %v1127
    %v1215 = vunpack.c.h.b16 %v1127
    %v1216 = vunpack.c.l.b16 %v1128
    %v1217 = vunpack.c.h.b16 %v1128
    %v1218 = vunpack.c.l.b16 %v1129
    %v1219 = vunpack.c.h.b16 %v1129
    %v1220 = vunpack.c.l.b16 %v1130
    %v1221 = vunpack.c.h.b16 %v1130
    %v1222 = vunpack.c.l.b16 %v1131
    %v1223 = vunpack.c.h.b16 %v1131
    %v1224 = vunpack.c.l.b16 %v1132
    %v1225 = vunpack.c.h.b16 %v1132
    %v1226 = vunpack.c.l.b16 %v1133
    %v1227 = vunpack.c.h.b16 %v1133
    %v1228 = vunpack.c.l.b16 %v1134
    %v1229 = vunpack.c.h.b16 %v1134
    %v1230 = vunpack.c.l.b16 %v1135
    %v1231 = vunpack.c.h.b16 %v1135
    %v1232 = vpack.c.b16 %v1170, %v1168
    %v1233 = vpack.c.b16 %v1171, %v1169
    %v1234 = vpack.c.b16 %v1174, %v1172
    %v1235 = vpack.c.b16 %v1175, %v1173
    %v1236 = vpack.c.b16 %v1178, %v1176
    %v1237 = vpack.c.b16 %v1179, %v1177
    %v1238 = vpack.c.b16 %v1182, %v1180
    %v1239 = vpack.c.b16 %v1183, %v1181
    %v1240 = vpack.c.b16 %v1186, %v1184
    %v1241 = vpack.c.b16 %v1187, %v1185
    %v1242 = vpack.c.b16 %v1190, %v1188
    %v1243 = vpack.c.b16 %v1191, %v1189
    %v1244 = vpack.c.b16 %v1194, %v1192
    %v1245 = vpack.c.b16 %v1195, %v1193
    %v1246 = vpack.c.b16 %v1198, %v1196
    %v1247 = vpack.c.b16 %v1199, %v1197
    %v1248 = vpack.c.b16 %v1202, %v1200
    %v1249 = vpack.c.b16 %v1203, %v1201
    %v1250 = vpack.c.b16 %v1206, %v1204
    %v1251 = vpack.c.b16 %v1207, %v1205
    %v1252 = vpack.c.b16 %v1210, %v1208
    %v1253 = vpack.c.b16 %v1211, %v1209
    %v1254 = vpack.c.b16 %v1214, %v1212
    %v1255 = vpack.c.b16 %v1215, %v1213
    %v1256 = vpack.c.b16 %v1218, %v1216
    %v1257 = vpack.c.b16 %v1219, %v1217
    %v1258 = vpack.c.b16 %v1222, %v1220
    %v1259 = vpack.c.b16 %v1223, %v1221
    %v1260 = vpack.c.b16 %v1226, %v1224
    %v1261 = vpack.c.b16 %v1227, %v1225
    %v1262 = vpack.c.b16 %v1230, %v1228
    %v1263 = vpack.c.b16 %v1231, %v1229
    %1296 = vmatprep.subr.bf16.mxu0 %v1233
    %1297 = vmatpush1.bf16.msra.mxu0 %v1232
    %1298 = vmatprep.subr.bf16.mxu0 %v1235
    %1299 = vmatpush1.bf16.msra.mxu0 %v1234
    %1300 = vmatprep.subr.bf16.mxu0 %v1237
    %1301 = vmatpush1.bf16.msra.mxu0 %v1236
    %1302 = vmatprep.subr.bf16.mxu0 %v1239
    %1303 = vmatpush1.bf16.msra.mxu0 %v1238
    %1304 = vmatprep.subr.bf16.mxu0 %v1241
    %1305 = vmatpush1.bf16.msra.mxu0 %v1240
    %1306 = vmatprep.subr.bf16.mxu0 %v1243
    %1307 = vmatpush1.bf16.msra.mxu0 %v1242
    %1308 = vmatprep.subr.bf16.mxu0 %v1245
    %1309 = vmatpush1.bf16.msra.mxu0 %v1244
    %1310 = vmatprep.subr.bf16.mxu0 %v1247
    %1311 = vmatpush1.bf16.msra.mxu0 %v1246
    %1312 = vmatprep.subr.bf16.mxu0 %v1249
    %1313 = vmatpush1.bf16.msra.mxu0 %v1248
    %1314 = vmatprep.subr.bf16.mxu0 %v1251
    %1315 = vmatpush1.bf16.msra.mxu0 %v1250
    %1316 = vmatprep.subr.bf16.mxu0 %v1253
    %1317 = vmatpush1.bf16.msra.mxu0 %v1252
    %1318 = vmatprep.subr.bf16.mxu0 %v1255
    %1319 = vmatpush1.bf16.msra.mxu0 %v1254
    %1320 = vmatprep.subr.bf16.mxu0 %v1257
    %1321 = vmatpush1.bf16.msra.mxu0 %v1256
    %1322 = vmatprep.subr.bf16.mxu0 %v1259
    %1323 = vmatpush1.bf16.msra.mxu0 %v1258
    %1324 = vmatprep.subr.bf16.mxu0 %v1261
    %1325 = vmatpush1.bf16.msra.mxu0 %v1260
    %1326 = vmatprep.subr.bf16.mxu0 %v1263
    %1327 = vmatpush1.bf16.msra.mxu0 %v1262
    %1328 = vmatprep.mubr.bf16.mxu0 %v1101
    %1329 = vmatmul.mubr.bf16.gmra.mrb[0].mxu0 %v1100
    %v1330 = vpop.f32.mrb[0].mxu0
    %v1331 = vadd.f32 0.0, %v1330
    %v1332 = vpop.f32.mrb[0].mxu0
    %v1333 = vadd.f32 0.0, %v1332
    %v1334 = vpop.f32.mrb[0].mxu0
    %v1335 = vadd.f32 0.0, %v1334
    %v1336 = vpop.f32.mrb[0].mxu0
    %v1337 = vadd.f32 0.0, %v1336
    %1338 = vmatprep.mubr.bf16.mxu0 %v1103
    %1339 = vmatmul.mubr.bf16.gmra.mrb[0].mxu0 %v1102
    %v1340 = vpop.f32.mrb[0].mxu0
    %v1341 = vadd.f32 0.0, %v1340
    %v1342 = vpop.f32.mrb[0].mxu0
    %v1343 = vadd.f32 0.0, %v1342
    %v1344 = vpop.f32.mrb[0].mxu0
    %v1345 = vadd.f32 0.0, %v1344
    %v1346 = vpop.f32.mrb[0].mxu0
    %v1347 = vadd.f32 0.0, %v1346
    %1348 = vdwg.mxu0
    %v1381 = vunpack.c.l.b16 %v1068
    %v1382 = vunpack.c.h.b16 %v1068
    %v1383 = vunpack.c.l.b16 %v1069
    %v1384 = vunpack.c.h.b16 %v1069
    %v1385 = vunpack.c.l.b16 %v1070
    %v1386 = vunpack.c.h.b16 %v1070
    %v1387 = vunpack.c.l.b16 %v1071
    %v1388 = vunpack.c.h.b16 %v1071
    %v1389 = vunpack.c.l.b16 %v1072
    %v1390 = vunpack.c.h.b16 %v1072
    %v1391 = vunpack.c.l.b16 %v1073
    %v1392 = vunpack.c.h.b16 %v1073
    %v1393 = vunpack.c.l.b16 %v1074
    %v1394 = vunpack.c.h.b16 %v1074
    %v1395 = vunpack.c.l.b16 %v1075
    %v1396 = vunpack.c.h.b16 %v1075
    %v1397 = vunpack.c.l.b16 %v1076
    %v1398 = vunpack.c.h.b16 %v1076
    %v1399 = vunpack.c.l.b16 %v1077
    %v1400 = vunpack.c.h.b16 %v1077
    %v1401 = vunpack.c.l.b16 %v1078
    %v1402 = vunpack.c.h.b16 %v1078
    %v1403 = vunpack.c.l.b16 %v1079
    %v1404 = vunpack.c.h.b16 %v1079
    %v1405 = vunpack.c.l.b16 %v1080
    %v1406 = vunpack.c.h.b16 %v1080
    %v1407 = vunpack.c.l.b16 %v1081
    %v1408 = vunpack.c.h.b16 %v1081
    %v1409 = vunpack.c.l.b16 %v1082
    %v1410 = vunpack.c.h.b16 %v1082
    %v1411 = vunpack.c.l.b16 %v1083
    %v1412 = vunpack.c.h.b16 %v1083
    %v1413 = vunpack.c.l.b16 %v1084
    %v1414 = vunpack.c.h.b16 %v1084
    %v1415 = vunpack.c.l.b16 %v1085
    %v1416 = vunpack.c.h.b16 %v1085
    %v1417 = vunpack.c.l.b16 %v1086
    %v1418 = vunpack.c.h.b16 %v1086
    %v1419 = vunpack.c.l.b16 %v1087
    %v1420 = vunpack.c.h.b16 %v1087
    %v1421 = vunpack.c.l.b16 %v1088
    %v1422 = vunpack.c.h.b16 %v1088
    %v1423 = vunpack.c.l.b16 %v1089
    %v1424 = vunpack.c.h.b16 %v1089
    %v1425 = vunpack.c.l.b16 %v1090
    %v1426 = vunpack.c.h.b16 %v1090
    %v1427 = vunpack.c.l.b16 %v1091
    %v1428 = vunpack.c.h.b16 %v1091
    %v1429 = vunpack.c.l.b16 %v1092
    %v1430 = vunpack.c.h.b16 %v1092
    %v1431 = vunpack.c.l.b16 %v1093
    %v1432 = vunpack.c.h.b16 %v1093
    %v1433 = vunpack.c.l.b16 %v1094
    %v1434 = vunpack.c.h.b16 %v1094
    %v1435 = vunpack.c.l.b16 %v1095
    %v1436 = vunpack.c.h.b16 %v1095
    %v1437 = vunpack.c.l.b16 %v1096
    %v1438 = vunpack.c.h.b16 %v1096
    %v1439 = vunpack.c.l.b16 %v1097
    %v1440 = vunpack.c.h.b16 %v1097
    %v1441 = vunpack.c.l.b16 %v1098
    %v1442 = vunpack.c.h.b16 %v1098
    %v1443 = vunpack.c.l.b16 %v1099
    %v1444 = vunpack.c.h.b16 %v1099
    %v1445 = vpack.c.b16 %v1383, %v1381
    %v1446 = vpack.c.b16 %v1384, %v1382
    %v1447 = vpack.c.b16 %v1387, %v1385
    %v1448 = vpack.c.b16 %v1388, %v1386
    %v1449 = vpack.c.b16 %v1391, %v1389
    %v1450 = vpack.c.b16 %v1392, %v1390
    %v1451 = vpack.c.b16 %v1395, %v1393
    %v1452 = vpack.c.b16 %v1396, %v1394
    %v1453 = vpack.c.b16 %v1399, %v1397
    %v1454 = vpack.c.b16 %v1400, %v1398
    %v1455 = vpack.c.b16 %v1403, %v1401
    %v1456 = vpack.c.b16 %v1404, %v1402
    %v1457 = vpack.c.b16 %v1407, %v1405
    %v1458 = vpack.c.b16 %v1408, %v1406
    %v1459 = vpack.c.b16 %v1411, %v1409
    %v1460 = vpack.c.b16 %v1412, %v1410
    %v1461 = vpack.c.b16 %v1415, %v1413
    %v1462 = vpack.c.b16 %v1416, %v1414
    %v1463 = vpack.c.b16 %v1419, %v1417
    %v1464 = vpack.c.b16 %v1420, %v1418
    %v1465 = vpack.c.b16 %v1423, %v1421
    %v1466 = vpack.c.b16 %v1424, %v1422
    %v1467 = vpack.c.b16 %v1427, %v1425
    %v1468 = vpack.c.b16 %v1428, %v1426
    %v1469 = vpack.c.b16 %v1431, %v1429
    %v1470 = vpack.c.b16 %v1432, %v1430
    %v1471 = vpack.c.b16 %v1435, %v1433
    %v1472 = vpack.c.b16 %v1436, %v1434
    %v1473 = vpack.c.b16 %v1439, %v1437
    %v1474 = vpack.c.b16 %v1440, %v1438
    %v1475 = vpack.c.b16 %v1443, %v1441
    %v1476 = vpack.c.b16 %v1444, %v1442
    %1509 = vmatprep.subr.bf16.mxu0 %v1446
    %1510 = vmatpush1.bf16.msra.mxu0 %v1445
    %1511 = vmatprep.subr.bf16.mxu0 %v1448
    %1512 = vmatpush1.bf16.msra.mxu0 %v1447
    %1513 = vmatprep.subr.bf16.mxu0 %v1450
    %1514 = vmatpush1.bf16.msra.mxu0 %v1449
    %1515 = vmatprep.subr.bf16.mxu0 %v1452
    %1516 = vmatpush1.bf16.msra.mxu0 %v1451
    %1517 = vmatprep.subr.bf16.mxu0 %v1454
    %1518 = vmatpush1.bf16.msra.mxu0 %v1453
    %1519 = vmatprep.subr.bf16.mxu0 %v1456
    %1520 = vmatpush1.bf16.msra.mxu0 %v1455
    %1521 = vmatprep.subr.bf16.mxu0 %v1458
    %1522 = vmatpush1.bf16.msra.mxu0 %v1457
    %1523 = vmatprep.subr.bf16.mxu0 %v1460
    %1524 = vmatpush1.bf16.msra.mxu0 %v1459
    %1525 = vmatprep.subr.bf16.mxu0 %v1462
    %1526 = vmatpush1.bf16.msra.mxu0 %v1461
    %1527 = vmatprep.subr.bf16.mxu0 %v1464
    %1528 = vmatpush1.bf16.msra.mxu0 %v1463
    %1529 = vmatprep.subr.bf16.mxu0 %v1466
    %1530 = vmatpush1.bf16.msra.mxu0 %v1465
    %1531 = vmatprep.subr.bf16.mxu0 %v1468
    %1532 = vmatpush1.bf16.msra.mxu0 %v1467
    %1533 = vmatprep.subr.bf16.mxu0 %v1470
    %1534 = vmatpush1.bf16.msra.mxu0 %v1469
    %1535 = vmatprep.subr.bf16.mxu0 %v1472
    %1536 = vmatpush1.bf16.msra.mxu0 %v1471
    %1537 = vmatprep.subr.bf16.mxu0 %v1474
    %1538 = vmatpush1.bf16.msra.mxu0 %v1473
    %1539 = vmatprep.subr.bf16.mxu0 %v1476
    %1540 = vmatpush1.bf16.msra.mxu0 %v1475
    %1541 = vmatprep.mubr.bf16.mxu0 %v1065
    %1542 = vmatmul.mubr.bf16.gmra.mrb[0].mxu0 %v1064
    %v1543 = vpop.f32.mrb[0].mxu0
    %v1544 = vadd.f32 %v1331, %v1543
    %v1545 = vpop.f32.mrb[0].mxu0
    %v1546 = vadd.f32 %v1333, %v1545
    %v1547 = vpop.f32.mrb[0].mxu0
    %v1548 = vadd.f32 %v1335, %v1547
    %v1549 = vpop.f32.mrb[0].mxu0
    %v1550 = vadd.f32 %v1337, %v1549
    %1551 = vmatprep.mubr.bf16.mxu0 %v1067
    %1552 = vmatmul.mubr.bf16.gmra.mrb[0].mxu0 %v1066
    %v1553 = vpop.f32.mrb[0].mxu0
    %v1554 = vadd.f32 %v1341, %v1553
    %v1555 = vpop.f32.mrb[0].mxu0
    %v1556 = vadd.f32 %v1343, %v1555
    %v1557 = vpop.f32.mrb[0].mxu0
    %v1558 = vadd.f32 %v1345, %v1557
    %v1559 = vpop.f32.mrb[0].mxu0
    %v1560 = vadd.f32 %v1347, %v1559
    %1561 = vdwg.mxu0
    %v1562 = vpack.c.bf16 %v1060, %v1056
    %v1563 = vpack.c.bf16 %v1061, %v1057
    %v1564 = vpack.c.bf16 %v1062, %v1058
    %v1565 = vpack.c.bf16 %v1063, %v1059
    %v1566 = vld [vmem:[#allocation8 + $0x200] sm:$0xff]
    %v1567 = vld [vmem:[#allocation8 + $0x208] sm:$0xff]
    %v1568 = vld [vmem:[#allocation8 + $0x210] sm:$0xff]
    %v1569 = vld [vmem:[#allocation8 + $0x218] sm:$0xff]
    %v1570 = vld [vmem:[#allocation8 + $0x220] sm:$0xff]
    %v1571 = vld [vmem:[#allocation8 + $0x228] sm:$0xff]
    %v1572 = vld [vmem:[#allocation8 + $0x230] sm:$0xff]
    %v1573 = vld [vmem:[#allocation8 + $0x238] sm:$0xff]
    %v1574 = vld [vmem:[#allocation8 + $0x240] sm:$0xff]
    %v1575 = vld [vmem:[#allocation8 + $0x248] sm:$0xff]
    %v1576 = vld [vmem:[#allocation8 + $0x250] sm:$0xff]
    %v1577 = vld [vmem:[#allocation8 + $0x258] sm:$0xff]
    %v1578 = vld [vmem:[#allocation8 + $0x260] sm:$0xff]
    %v1579 = vld [vmem:[#allocation8 + $0x268] sm:$0xff]
    %v1580 = vld [vmem:[#allocation8 + $0x270] sm:$0xff]
    %v1581 = vld [vmem:[#allocation8 + $0x278] sm:$0xff]
    %v1582 = vld [vmem:[#allocation8 + $0x280] sm:$0xff]
    %v1583 = vld [vmem:[#allocation8 + $0x288] sm:$0xff]
    %v1584 = vld [vmem:[#allocation8 + $0x290] sm:$0xff]
    %v1585 = vld [vmem:[#allocation8 + $0x298] sm:$0xff]
    %v1586 = vld [vmem:[#allocation8 + $0x2a0] sm:$0xff]
    %v1587 = vld [vmem:[#allocation8 + $0x2a8] sm:$0xff]
    %v1588 = vld [vmem:[#allocation8 + $0x2b0] sm:$0xff]
    %v1589 = vld [vmem:[#allocation8 + $0x2b8] sm:$0xff]
    %v1590 = vld [vmem:[#allocation8 + $0x2c0] sm:$0xff]
    %v1591 = vld [vmem:[#allocation8 + $0x2c8] sm:$0xff]
    %v1592 = vld [vmem:[#allocation8 + $0x2d0] sm:$0xff]
    %v1593 = vld [vmem:[#allocation8 + $0x2d8] sm:$0xff]
    %v1594 = vld [vmem:[#allocation8 + $0x2e0] sm:$0xff]
    %v1595 = vld [vmem:[#allocation8 + $0x2e8] sm:$0xff]
    %v1596 = vld [vmem:[#allocation8 + $0x2f0] sm:$0xff]
    %v1597 = vld [vmem:[#allocation8 + $0x2f8] sm:$0xff]
    %v1630 = vunpack.c.l.b16 %v1566
    %v1631 = vunpack.c.h.b16 %v1566
    %v1632 = vunpack.c.l.b16 %v1567
    %v1633 = vunpack.c.h.b16 %v1567
    %v1634 = vunpack.c.l.b16 %v1568
    %v1635 = vunpack.c.h.b16 %v1568
    %v1636 = vunpack.c.l.b16 %v1569
    %v1637 = vunpack.c.h.b16 %v1569
    %v1638 = vunpack.c.l.b16 %v1570
    %v1639 = vunpack.c.h.b16 %v1570
    %v1640 = vunpack.c.l.b16 %v1571
    %v1641 = vunpack.c.h.b16 %v1571
    %v1642 = vunpack.c.l.b16 %v1572
    %v1643 = vunpack.c.h.b16 %v1572
    %v1644 = vunpack.c.l.b16 %v1573
    %v1645 = vunpack.c.h.b16 %v1573
    %v1646 = vunpack.c.l.b16 %v1574
    %v1647 = vunpack.c.h.b16 %v1574
    %v1648 = vunpack.c.l.b16 %v1575
    %v1649 = vunpack.c.h.b16 %v1575
    %v1650 = vunpack.c.l.b16 %v1576
    %v1651 = vunpack.c.h.b16 %v1576
    %v1652 = vunpack.c.l.b16 %v1577
    %v1653 = vunpack.c.h.b16 %v1577
    %v1654 = vunpack.c.l.b16 %v1578
    %v1655 = vunpack.c.h.b16 %v1578
    %v1656 = vunpack.c.l.b16 %v1579
    %v1657 = vunpack.c.h.b16 %v1579
    %v1658 = vunpack.c.l.b16 %v1580
    %v1659 = vunpack.c.h.b16 %v1580
    %v1660 = vunpack.c.l.b16 %v1581
    %v1661 = vunpack.c.h.b16 %v1581
    %v1662 = vunpack.c.l.b16 %v1582
    %v1663 = vunpack.c.h.b16 %v1582
    %v1664 = vunpack.c.l.b16 %v1583
    %v1665 = vunpack.c.h.b16 %v1583
    %v1666 = vunpack.c.l.b16 %v1584
    %v1667 = vunpack.c.h.b16 %v1584
    %v1668 = vunpack.c.l.b16 %v1585
    %v1669 = vunpack.c.h.b16 %v1585
    %v1670 = vunpack.c.l.b16 %v1586
    %v1671 = vunpack.c.h.b16 %v1586
    %v1672 = vunpack.c.l.b16 %v1587
    %v1673 = vunpack.c.h.b16 %v1587
    %v1674 = vunpack.c.l.b16 %v1588
    %v1675 = vunpack.c.h.b16 %v1588
    %v1676 = vunpack.c.l.b16 %v1589
    %v1677 = vunpack.c.h.b16 %v1589
    %v1678 = vunpack.c.l.b16 %v1590
    %v1679 = vunpack.c.h.b16 %v1590
    %v1680 = vunpack.c.l.b16 %v1591
    %v1681 = vunpack.c.h.b16 %v1591
    %v1682 = vunpack.c.l.b16 %v1592
    %v1683 = vunpack.c.h.b16 %v1592
    %v1684 = vunpack.c.l.b16 %v1593
    %v1685 = vunpack.c.h.b16 %v1593
    %v1686 = vunpack.c.l.b16 %v1594
    %v1687 = vunpack.c.h.b16 %v1594
    %v1688 = vunpack.c.l.b16 %v1595
    %v1689 = vunpack.c.h.b16 %v1595
    %v1690 = vunpack.c.l.b16 %v1596
    %v1691 = vunpack.c.h.b16 %v1596
    %v1692 = vunpack.c.l.b16 %v1597
    %v1693 = vunpack.c.h.b16 %v1597
    %v1694 = vpack.c.b16 %v1632, %v1630
    %v1695 = vpack.c.b16 %v1633, %v1631
    %v1696 = vpack.c.b16 %v1636, %v1634
    %v1697 = vpack.c.b16 %v1637, %v1635
    %v1698 = vpack.c.b16 %v1640, %v1638
    %v1699 = vpack.c.b16 %v1641, %v1639
    %v1700 = vpack.c.b16 %v1644, %v1642
    %v1701 = vpack.c.b16 %v1645, %v1643
    %v1702 = vpack.c.b16 %v1648, %v1646
    %v1703 = vpack.c.b16 %v1649, %v1647
    %v1704 = vpack.c.b16 %v1652, %v1650
    %v1705 = vpack.c.b16 %v1653, %v1651
    %v1706 = vpack.c.b16 %v1656, %v1654
    %v1707 = vpack.c.b16 %v1657, %v1655
    %v1708 = vpack.c.b16 %v1660, %v1658
    %v1709 = vpack.c.b16 %v1661, %v1659
    %v1710 = vpack.c.b16 %v1664, %v1662
    %v1711 = vpack.c.b16 %v1665, %v1663
    %v1712 = vpack.c.b16 %v1668, %v1666
    %v1713 = vpack.c.b16 %v1669, %v1667
    %v1714 = vpack.c.b16 %v1672, %v1670
    %v1715 = vpack.c.b16 %v1673, %v1671
    %v1716 = vpack.c.b16 %v1676, %v1674
    %v1717 = vpack.c.b16 %v1677, %v1675
    %v1718 = vpack.c.b16 %v1680, %v1678
    %v1719 = vpack.c.b16 %v1681, %v1679
    %v1720 = vpack.c.b16 %v1684, %v1682
    %v1721 = vpack.c.b16 %v1685, %v1683
    %v1722 = vpack.c.b16 %v1688, %v1686
    %v1723 = vpack.c.b16 %v1689, %v1687
    %v1724 = vpack.c.b16 %v1692, %v1690
    %v1725 = vpack.c.b16 %v1693, %v1691
    %1758 = vmatprep.subr.bf16.mxu0 %v1695
    %1759 = vmatpush1.bf16.msra.mxu0 %v1694
    %1760 = vmatprep.subr.bf16.mxu0 %v1697
    %1761 = vmatpush1.bf16.msra.mxu0 %v1696
    %1762 = vmatprep.subr.bf16.mxu0 %v1699
    %1763 = vmatpush1.bf16.msra.mxu0 %v1698
    %1764 = vmatprep.subr.bf16.mxu0 %v1701
    %1765 = vmatpush1.bf16.msra.mxu0 %v1700
    %1766 = vmatprep.subr.bf16.mxu0 %v1703
    %1767 = vmatpush1.bf16.msra.mxu0 %v1702
    %1768 = vmatprep.subr.bf16.mxu0 %v1705
    %1769 = vmatpush1.bf16.msra.mxu0 %v1704
    %1770 = vmatprep.subr.bf16.mxu0 %v1707
    %1771 = vmatpush1.bf16.msra.mxu0 %v1706
    %1772 = vmatprep.subr.bf16.mxu0 %v1709
    %1773 = vmatpush1.bf16.msra.mxu0 %v1708
    %1774 = vmatprep.subr.bf16.mxu0 %v1711
    %1775 = vmatpush1.bf16.msra.mxu0 %v1710
    %1776 = vmatprep.subr.bf16.mxu0 %v1713
    %1777 = vmatpush1.bf16.msra.mxu0 %v1712
    %1778 = vmatprep.subr.bf16.mxu0 %v1715
    %1779 = vmatpush1.bf16.msra.mxu0 %v1714
    %1780 = vmatprep.subr.bf16.mxu0 %v1717
    %1781 = vmatpush1.bf16.msra.mxu0 %v1716
    %1782 = vmatprep.subr.bf16.mxu0 %v1719
    %1783 = vmatpush1.bf16.msra.mxu0 %v1718
    %1784 = vmatprep.subr.bf16.mxu0 %v1721
    %1785 = vmatpush1.bf16.msra.mxu0 %v1720
    %1786 = vmatprep.subr.bf16.mxu0 %v1723
    %1787 = vmatpush1.bf16.msra.mxu0 %v1722
    %1788 = vmatprep.subr.bf16.mxu0 %v1725
    %1789 = vmatpush1.bf16.msra.mxu0 %v1724
    %1790 = vmatprep.mubr.bf16.mxu0 %v1563
    %1791 = vmatmul.mubr.bf16.gmra.mrb[0].mxu0 %v1562
    %v1792 = vpop.f32.mrb[0].mxu0
    %v1793 = vadd.f32 0.0, %v1792
    %v1794 = vpop.f32.mrb[0].mxu0
    %v1795 = vadd.f32 0.0, %v1794
    %v1796 = vpop.f32.mrb[0].mxu0
    %v1797 = vadd.f32 0.0, %v1796
    %v1798 = vpop.f32.mrb[0].mxu0
    %v1799 = vadd.f32 0.0, %v1798
    %1800 = vmatprep.mubr.bf16.mxu0 %v1565
    %1801 = vmatmul.mubr.bf16.gmra.mrb[0].mxu0 %v1564
    %v1802 = vpop.f32.mrb[0].mxu0
    %v1803 = vadd.f32 0.0, %v1802
    %v1804 = vpop.f32.mrb[0].mxu0
    %v1805 = vadd.f32 0.0, %v1804
    %v1806 = vpop.f32.mrb[0].mxu0
    %v1807 = vadd.f32 0.0, %v1806
    %v1808 = vpop.f32.mrb[0].mxu0
    %v1809 = vadd.f32 0.0, %v1808
    %1810 = vdwg.mxu0
    %v1811 = vadd.f32 %v1544, %v1793
    %v1812 = vadd.f32 %v1546, %v1795
    %v1813 = vadd.f32 %v1548, %v1797
    %v1814 = vadd.f32 %v1550, %v1799
    %v1815 = vadd.f32 %v1554, %v1803
    %v1816 = vadd.f32 %v1556, %v1805
    %v1817 = vadd.f32 %v1558, %v1807
    %v1818 = vadd.f32 %v1560, %v1809
    %v1819 = vld [vmem:[%s6] sm:$0x3]
    %v1821 = vlaneseq
    %v1822 = vshrl.u32 %v1821, 7
    %v1823 = vsub.s32 0, %v1822
    %v1824 = vrot.slane %v1819, %v1823
    %v1825 = vlaneseq
    %v1826 = vshrl.u32 %v1825, 7
    %v1827 = vsub.s32 1, %v1826
    %v1828 = vrot.slane %v1819, %v1827
    %v1831 = vadd.f32 %v1811, %v1824
    %v1832 = vadd.f32 %v1812, %v1828
    %v1833 = vadd.f32 %v1813, %v1824
    %v1834 = vadd.f32 %v1814, %v1828
    %v1835 = vadd.f32 %v1815, %v1824
    %v1836 = vadd.f32 %v1816, %v1828
    %v1837 = vadd.f32 %v1817, %v1824
    %v1838 = vadd.f32 %v1818, %v1828
    %v1839 = vmax.f32 %v1831, 0.0
    %v1840 = vmax.f32 %v1832, 0.0
    %v1841 = vmax.f32 %v1833, 0.0
    %v1842 = vmax.f32 %v1834, 0.0
    %v1843 = vmax.f32 %v1835, 0.0
    %v1844 = vmax.f32 %v1836, 0.0
    %v1845 = vmax.f32 %v1837, 0.0
    %v1846 = vmax.f32 %v1838, 0.0
    %v1847 = vrot.slane %v1839, 7
    %v1848 = vrot.slane %v1840, 7
    %v1849 = vrot.slane %v1843, 7
    %v1850 = vrot.slane %v1844, 7
    %v1851 = vrot.slane %v1841, 7
    %v1852 = vrot.slane %v1842, 7
    %v1853 = vrot.slane %v1845, 7
    %v1854 = vrot.slane %v1846, 7
    %v1855 = vsel %vm149, %v1847, %v1851
    %v1856 = vsel %vm149, %v1848, %v1852
    %v1857 = vsel %vm149, %v1849, %v1853
    %v1858 = vsel %vm149, %v1850, %v1854
    %v1859 = vsel %vm149, %v1851, %v1847
    %v1860 = vsel %vm149, %v1852, %v1848
    %v1861 = vsel %vm149, %v1853, %v1849
    %v1862 = vsel %vm149, %v1854, %v1850
    %v1863 = vrot.slane %v1839, 1
    %v1864 = vrot.slane %v1840, 1
    %v1865 = vrot.slane %v1843, 1
    %v1866 = vrot.slane %v1844, 1
    %v1867 = vrot.slane %v1841, 1
    %v1868 = vrot.slane %v1842, 1
    %v1869 = vrot.slane %v1845, 1
    %v1870 = vrot.slane %v1846, 1
    %v1871 = vsel %vm158, %v1863, %v1867
    %v1872 = vsel %vm158, %v1864, %v1868
    %v1873 = vsel %vm158, %v1865, %v1869
    %v1874 = vsel %vm158, %v1866, %v1870
    %v1875 = vsel %vm158, %v1867, %v1863
    %v1876 = vsel %vm158, %v1868, %v1864
    %v1877 = vsel %vm158, %v1869, %v1865
    %v1878 = vsel %vm158, %v1870, %v1866
    %v1879 = vpack.c.bf16 %v1855, %v1859
    %v1880 = vpack.c.bf16 %v1856, %v1860
    %v1881 = vpack.c.bf16 %v1857, %v1861
    %v1882 = vpack.c.bf16 %v1858, %v1862
    %v1883 = vld [vmem:[#allocation10] sm:$0xf]
    %v1884 = vld [vmem:[#allocation10 + $0x4] sm:$0xf]
    %v1885 = vld [vmem:[#allocation10 + $0x8] sm:$0xf]
    %v1886 = vld [vmem:[#allocation10 + $0xc] sm:$0xf]
    %v1887 = vld [vmem:[#allocation10 + $0x10] sm:$0xf]
    %v1888 = vld [vmem:[#allocation10 + $0x14] sm:$0xf]
    %v1889 = vld [vmem:[#allocation10 + $0x18] sm:$0xf]
    %v1890 = vld [vmem:[#allocation10 + $0x1c] sm:$0xf]
    %v1891 = vld [vmem:[#allocation10 + $0x20] sm:$0xf]
    %v1892 = vld [vmem:[#allocation10 + $0x24] sm:$0xf]
    %v1893 = vld [vmem:[#allocation10 + $0x28] sm:$0xf]
    %v1894 = vld [vmem:[#allocation10 + $0x2c] sm:$0xf]
    %v1895 = vld [vmem:[#allocation10 + $0x30] sm:$0xf]
    %v1896 = vld [vmem:[#allocation10 + $0x34] sm:$0xf]
    %v1897 = vld [vmem:[#allocation10 + $0x38] sm:$0xf]
    %v1898 = vld [vmem:[#allocation10 + $0x3c] sm:$0xf]
    %v1899 = vld [vmem:[#allocation10 + $0x40] sm:$0xf]
    %v1900 = vld [vmem:[#allocation10 + $0x44] sm:$0xf]
    %v1901 = vld [vmem:[#allocation10 + $0x48] sm:$0xf]
    %v1902 = vld [vmem:[#allocation10 + $0x4c] sm:$0xf]
    %v1903 = vld [vmem:[#allocation10 + $0x50] sm:$0xf]
    %v1904 = vld [vmem:[#allocation10 + $0x54] sm:$0xf]
    %v1905 = vld [vmem:[#allocation10 + $0x58] sm:$0xf]
    %v1906 = vld [vmem:[#allocation10 + $0x5c] sm:$0xf]
    %v1907 = vld [vmem:[#allocation10 + $0x60] sm:$0xf]
    %v1908 = vld [vmem:[#allocation10 + $0x64] sm:$0xf]
    %v1909 = vld [vmem:[#allocation10 + $0x68] sm:$0xf]
    %v1910 = vld [vmem:[#allocation10 + $0x6c] sm:$0xf]
    %v1911 = vld [vmem:[#allocation10 + $0x70] sm:$0xf]
    %v1912 = vld [vmem:[#allocation10 + $0x74] sm:$0xf]
    %v1913 = vld [vmem:[#allocation10 + $0x78] sm:$0xf]
    %v1914 = vld [vmem:[#allocation10 + $0x7c] sm:$0xf]
    %v1915 = vpack.c.bf16 %v1841, %v1839
    %v1916 = vpack.c.bf16 %v1842, %v1840
    %v1917 = vpack.c.bf16 %v1845, %v1843
    %v1918 = vpack.c.bf16 %v1846, %v1844
    %v1919 = vld [vmem:[#allocation10 + $0x80] sm:$0xf]
    %v1920 = vld [vmem:[#allocation10 + $0x84] sm:$0xf]
    %v1921 = vld [vmem:[#allocation10 + $0x88] sm:$0xf]
    %v1922 = vld [vmem:[#allocation10 + $0x8c] sm:$0xf]
    %v1923 = vld [vmem:[#allocation10 + $0x90] sm:$0xf]
    %v1924 = vld [vmem:[#allocation10 + $0x94] sm:$0xf]
    %v1925 = vld [vmem:[#allocation10 + $0x98] sm:$0xf]
    %v1926 = vld [vmem:[#allocation10 + $0x9c] sm:$0xf]
    %v1927 = vld [vmem:[#allocation10 + $0xa0] sm:$0xf]
    %v1928 = vld [vmem:[#allocation10 + $0xa4] sm:$0xf]
    %v1929 = vld [vmem:[#allocation10 + $0xa8] sm:$0xf]
    %v1930 = vld [vmem:[#allocation10 + $0xac] sm:$0xf]
    %v1931 = vld [vmem:[#allocation10 + $0xb0] sm:$0xf]
    %v1932 = vld [vmem:[#allocation10 + $0xb4] sm:$0xf]
    %v1933 = vld [vmem:[#allocation10 + $0xb8] sm:$0xf]
    %v1934 = vld [vmem:[#allocation10 + $0xbc] sm:$0xf]
    %v1935 = vld [vmem:[#allocation10 + $0xc0] sm:$0xf]
    %v1936 = vld [vmem:[#allocation10 + $0xc4] sm:$0xf]
    %v1937 = vld [vmem:[#allocation10 + $0xc8] sm:$0xf]
    %v1938 = vld [vmem:[#allocation10 + $0xcc] sm:$0xf]
    %v1939 = vld [vmem:[#allocation10 + $0xd0] sm:$0xf]
    %v1940 = vld [vmem:[#allocation10 + $0xd4] sm:$0xf]
    %v1941 = vld [vmem:[#allocation10 + $0xd8] sm:$0xf]
    %v1942 = vld [vmem:[#allocation10 + $0xdc] sm:$0xf]
    %v1943 = vld [vmem:[#allocation10 + $0xe0] sm:$0xf]
    %v1944 = vld [vmem:[#allocation10 + $0xe4] sm:$0xf]
    %v1945 = vld [vmem:[#allocation10 + $0xe8] sm:$0xf]
    %v1946 = vld [vmem:[#allocation10 + $0xec] sm:$0xf]
    %v1947 = vld [vmem:[#allocation10 + $0xf0] sm:$0xf]
    %v1948 = vld [vmem:[#allocation10 + $0xf4] sm:$0xf]
    %v1949 = vld [vmem:[#allocation10 + $0xf8] sm:$0xf]
    %v1950 = vld [vmem:[#allocation10 + $0xfc] sm:$0xf]
    %v1983 = vunpack.c.l.b16 %v1919
    %v1984 = vunpack.c.l.b16 %v1920
    %v1985 = vunpack.c.l.b16 %v1921
    %v1986 = vunpack.c.l.b16 %v1922
    %v1987 = vunpack.c.l.b16 %v1923
    %v1988 = vunpack.c.l.b16 %v1924
    %v1989 = vunpack.c.l.b16 %v1925
    %v1990 = vunpack.c.l.b16 %v1926
    %v1991 = vunpack.c.l.b16 %v1927
    %v1992 = vunpack.c.l.b16 %v1928
    %v1993 = vunpack.c.l.b16 %v1929
    %v1994 = vunpack.c.l.b16 %v1930
    %v1995 = vunpack.c.l.b16 %v1931
    %v1996 = vunpack.c.l.b16 %v1932
    %v1997 = vunpack.c.l.b16 %v1933
    %v1998 = vunpack.c.l.b16 %v1934
    %v1999 = vunpack.c.l.b16 %v1935
    %v2000 = vunpack.c.l.b16 %v1936
    %v2001 = vunpack.c.l.b16 %v1937
    %v2002 = vunpack.c.l.b16 %v1938
    %v2003 = vunpack.c.l.b16 %v1939
    %v2004 = vunpack.c.l.b16 %v1940
    %v2005 = vunpack.c.l.b16 %v1941
    %v2006 = vunpack.c.l.b16 %v1942
    %v2007 = vunpack.c.l.b16 %v1943
    %v2008 = vunpack.c.l.b16 %v1944
    %v2009 = vunpack.c.l.b16 %v1945
    %v2010 = vunpack.c.l.b16 %v1946
    %v2011 = vunpack.c.l.b16 %v1947
    %v2012 = vunpack.c.l.b16 %v1948
    %v2013 = vunpack.c.l.b16 %v1949
    %v2014 = vunpack.c.l.b16 %v1950
    %v2015 = vpack.c.b16 %v1984, %v1983
    %v2016 = vpack.c.b16 %v1986, %v1985
    %v2017 = vpack.c.b16 %v1988, %v1987
    %v2018 = vpack.c.b16 %v1990, %v1989
    %v2019 = vpack.c.b16 %v1992, %v1991
    %v2020 = vpack.c.b16 %v1994, %v1993
    %v2021 = vpack.c.b16 %v1996, %v1995
    %v2022 = vpack.c.b16 %v1998, %v1997
    %v2023 = vpack.c.b16 %v2000, %v1999
    %v2024 = vpack.c.b16 %v2002, %v2001
    %v2025 = vpack.c.b16 %v2004, %v2003
    %v2026 = vpack.c.b16 %v2006, %v2005
    %v2027 = vpack.c.b16 %v2008, %v2007
    %v2028 = vpack.c.b16 %v2010, %v2009
    %v2029 = vpack.c.b16 %v2012, %v2011
    %v2030 = vpack.c.b16 %v2014, %v2013
    %2047 = vmatprep.subr.bf16.mxu0 0
    %2048 = vmatpush1.bf16.msra.mxu0 %v2015
    %2049 = vmatprep.subr.bf16.mxu0 0
    %2050 = vmatpush1.bf16.msra.mxu0 %v2016
    %2051 = vmatprep.subr.bf16.mxu0 0
    %2052 = vmatpush1.bf16.msra.mxu0 %v2017
    %2053 = vmatprep.subr.bf16.mxu0 0
    %2054 = vmatpush1.bf16.msra.mxu0 %v2018
    %2055 = vmatprep.subr.bf16.mxu0 0
    %2056 = vmatpush1.bf16.msra.mxu0 %v2019
    %2057 = vmatprep.subr.bf16.mxu0 0
    %2058 = vmatpush1.bf16.msra.mxu0 %v2020
    %2059 = vmatprep.subr.bf16.mxu0 0
    %2060 = vmatpush1.bf16.msra.mxu0 %v2021
    %2061 = vmatprep.subr.bf16.mxu0 0
    %2062 = vmatpush1.bf16.msra.mxu0 %v2022
    %2063 = vmatprep.subr.bf16.mxu0 0
    %2064 = vmatpush1.bf16.msra.mxu0 %v2023
    %2065 = vmatprep.subr.bf16.mxu0 0
    %2066 = vmatpush1.bf16.msra.mxu0 %v2024
    %2067 = vmatprep.subr.bf16.mxu0 0
    %2068 = vmatpush1.bf16.msra.mxu0 %v2025
    %2069 = vmatprep.subr.bf16.mxu0 0
    %2070 = vmatpush1.bf16.msra.mxu0 %v2026
    %2071 = vmatprep.subr.bf16.mxu0 0
    %2072 = vmatpush1.bf16.msra.mxu0 %v2027
    %2073 = vmatprep.subr.bf16.mxu0 0
    %2074 = vmatpush1.bf16.msra.mxu0 %v2028
    %2075 = vmatprep.subr.bf16.mxu0 0
    %2076 = vmatpush1.bf16.msra.mxu0 %v2029
    %2077 = vmatprep.subr.bf16.mxu0 0
    %2078 = vmatpush1.bf16.msra.mxu0 %v2030
    %2079 = vmatprep.mubr.bf16.mxu0 %v1916
    %2080 = vmatmul.mubr.bf16.gmra.mrb[0].mxu0 %v1915
    %v2081 = vpop.f32.mrb[0].mxu0
    %v2082 = vadd.f32 0.0, %v2081
    %v2083 = vpop.f32.mrb[0].mxu0
    %v2084 = vpop.f32.mrb[0].mxu0
    %v2085 = vadd.f32 0.0, %v2084
    %v2086 = vpop.f32.mrb[0].mxu0
    %2087 = vmatprep.mubr.bf16.mxu0 %v1918
    %2088 = vmatmul.mubr.bf16.gmra.mrb[0].mxu0 %v1917
    %v2089 = vpop.f32.mrb[0].mxu0
    %v2090 = vadd.f32 0.0, %v2089
    %v2091 = vpop.f32.mrb[0].mxu0
    %v2092 = vpop.f32.mrb[0].mxu0
    %v2093 = vadd.f32 0.0, %v2092
    %v2094 = vpop.f32.mrb[0].mxu0
    %2095 = vdwg.mxu0
    %v2128 = vunpack.c.l.b16 %v1883
    %v2129 = vunpack.c.l.b16 %v1884
    %v2130 = vunpack.c.l.b16 %v1885
    %v2131 = vunpack.c.l.b16 %v1886
    %v2132 = vunpack.c.l.b16 %v1887
    %v2133 = vunpack.c.l.b16 %v1888
    %v2134 = vunpack.c.l.b16 %v1889
    %v2135 = vunpack.c.l.b16 %v1890
    %v2136 = vunpack.c.l.b16 %v1891
    %v2137 = vunpack.c.l.b16 %v1892
    %v2138 = vunpack.c.l.b16 %v1893
    %v2139 = vunpack.c.l.b16 %v1894
    %v2140 = vunpack.c.l.b16 %v1895
    %v2141 = vunpack.c.l.b16 %v1896
    %v2142 = vunpack.c.l.b16 %v1897
    %v2143 = vunpack.c.l.b16 %v1898
    %v2144 = vunpack.c.l.b16 %v1899
    %v2145 = vunpack.c.l.b16 %v1900
    %v2146 = vunpack.c.l.b16 %v1901
    %v2147 = vunpack.c.l.b16 %v1902
    %v2148 = vunpack.c.l.b16 %v1903
    %v2149 = vunpack.c.l.b16 %v1904
    %v2150 = vunpack.c.l.b16 %v1905
    %v2151 = vunpack.c.l.b16 %v1906
    %v2152 = vunpack.c.l.b16 %v1907
    %v2153 = vunpack.c.l.b16 %v1908
    %v2154 = vunpack.c.l.b16 %v1909
    %v2155 = vunpack.c.l.b16 %v1910
    %v2156 = vunpack.c.l.b16 %v1911
    %v2157 = vunpack.c.l.b16 %v1912
    %v2158 = vunpack.c.l.b16 %v1913
    %v2159 = vunpack.c.l.b16 %v1914
    %v2160 = vpack.c.b16 %v2129, %v2128
    %v2161 = vpack.c.b16 %v2131, %v2130
    %v2162 = vpack.c.b16 %v2133, %v2132
    %v2163 = vpack.c.b16 %v2135, %v2134
    %v2164 = vpack.c.b16 %v2137, %v2136
    %v2165 = vpack.c.b16 %v2139, %v2138
    %v2166 = vpack.c.b16 %v2141, %v2140
    %v2167 = vpack.c.b16 %v2143, %v2142
    %v2168 = vpack.c.b16 %v2145, %v2144
    %v2169 = vpack.c.b16 %v2147, %v2146
    %v2170 = vpack.c.b16 %v2149, %v2148
    %v2171 = vpack.c.b16 %v2151, %v2150
    %v2172 = vpack.c.b16 %v2153, %v2152
    %v2173 = vpack.c.b16 %v2155, %v2154
    %v2174 = vpack.c.b16 %v2157, %v2156
    %v2175 = vpack.c.b16 %v2159, %v2158
    %2192 = vmatprep.subr.bf16.mxu0 0
    %2193 = vmatpush1.bf16.msra.mxu0 %v2160
    %2194 = vmatprep.subr.bf16.mxu0 0
    %2195 = vmatpush1.bf16.msra.mxu0 %v2161
    %2196 = vmatprep.subr.bf16.mxu0 0
    %2197 = vmatpush1.bf16.msra.mxu0 %v2162
    %2198 = vmatprep.subr.bf16.mxu0 0
    %2199 = vmatpush1.bf16.msra.mxu0 %v2163
    %2200 = vmatprep.subr.bf16.mxu0 0
    %2201 = vmatpush1.bf16.msra.mxu0 %v2164
    %2202 = vmatprep.subr.bf16.mxu0 0
    %2203 = vmatpush1.bf16.msra.mxu0 %v2165
    %2204 = vmatprep.subr.bf16.mxu0 0
    %2205 = vmatpush1.bf16.msra.mxu0 %v2166
    %2206 = vmatprep.subr.bf16.mxu0 0
    %2207 = vmatpush1.bf16.msra.mxu0 %v2167
    %2208 = vmatprep.subr.bf16.mxu0 0
    %2209 = vmatpush1.bf16.msra.mxu0 %v2168
    %2210 = vmatprep.subr.bf16.mxu0 0
    %2211 = vmatpush1.bf16.msra.mxu0 %v2169
    %2212 = vmatprep.subr.bf16.mxu0 0
    %2213 = vmatpush1.bf16.msra.mxu0 %v2170
    %2214 = vmatprep.subr.bf16.mxu0 0
    %2215 = vmatpush1.bf16.msra.mxu0 %v2171
    %2216 = vmatprep.subr.bf16.mxu0 0
    %2217 = vmatpush1.bf16.msra.mxu0 %v2172
    %2218 = vmatprep.subr.bf16.mxu0 0
    %2219 = vmatpush1.bf16.msra.mxu0 %v2173
    %2220 = vmatprep.subr.bf16.mxu0 0
    %2221 = vmatpush1.bf16.msra.mxu0 %v2174
    %2222 = vmatprep.subr.bf16.mxu0 0
    %2223 = vmatpush1.bf16.msra.mxu0 %v2175
    %2224 = vmatprep.mubr.bf16.mxu0 %v1880
    %2225 = vmatmul.mubr.bf16.gmra.mrb[0].mxu0 %v1879
    %v2226 = vpop.f32.mrb[0].mxu0
    %v2227 = vadd.f32 %v2082, %v2226
    %v2228 = vpop.f32.mrb[0].mxu0
    %v2229 = vpop.f32.mrb[0].mxu0
    %v2230 = vadd.f32 %v2085, %v2229
    %v2231 = vpop.f32.mrb[0].mxu0
    %2232 = vmatprep.mubr.bf16.mxu0 %v1882
    %2233 = vmatmul.mubr.bf16.gmra.mrb[0].mxu0 %v1881
    %v2234 = vpop.f32.mrb[0].mxu0
    %v2235 = vadd.f32 %v2090, %v2234
    %v2236 = vpop.f32.mrb[0].mxu0
    %v2237 = vpop.f32.mrb[0].mxu0
    %v2238 = vadd.f32 %v2093, %v2237
    %v2239 = vpop.f32.mrb[0].mxu0
    %2240 = vdwg.mxu0
    %v2241 = vpack.c.bf16 %v1875, %v1871
    %v2242 = vpack.c.bf16 %v1876, %v1872
    %v2243 = vpack.c.bf16 %v1877, %v1873
    %v2244 = vpack.c.bf16 %v1878, %v1874
    %v2245 = vld [vmem:[#allocation10 + $0x100] sm:$0xf]
    %v2246 = vld [vmem:[#allocation10 + $0x104] sm:$0xf]
    %v2247 = vld [vmem:[#allocation10 + $0x108] sm:$0xf]
    %v2248 = vld [vmem:[#allocation10 + $0x10c] sm:$0xf]
    %v2249 = vld [vmem:[#allocation10 + $0x110] sm:$0xf]
    %v2250 = vld [vmem:[#allocation10 + $0x114] sm:$0xf]
    %v2251 = vld [vmem:[#allocation10 + $0x118] sm:$0xf]
    %v2252 = vld [vmem:[#allocation10 + $0x11c] sm:$0xf]
    %v2253 = vld [vmem:[#allocation10 + $0x120] sm:$0xf]
    %v2254 = vld [vmem:[#allocation10 + $0x124] sm:$0xf]
    %v2255 = vld [vmem:[#allocation10 + $0x128] sm:$0xf]
    %v2256 = vld [vmem:[#allocation10 + $0x12c] sm:$0xf]
    %v2257 = vld [vmem:[#allocation10 + $0x130] sm:$0xf]
    %v2258 = vld [vmem:[#allocation10 + $0x134] sm:$0xf]
    %v2259 = vld [vmem:[#allocation10 + $0x138] sm:$0xf]
    %v2260 = vld [vmem:[#allocation10 + $0x13c] sm:$0xf]
    %v2261 = vld [vmem:[#allocation10 + $0x140] sm:$0xf]
    %v2262 = vld [vmem:[#allocation10 + $0x144] sm:$0xf]
    %v2263 = vld [vmem:[#allocation10 + $0x148] sm:$0xf]
    %v2264 = vld [vmem:[#allocation10 + $0x14c] sm:$0xf]
    %v2265 = vld [vmem:[#allocation10 + $0x150] sm:$0xf]
    %v2266 = vld [vmem:[#allocation10 + $0x154] sm:$0xf]
    %v2267 = vld [vmem:[#allocation10 + $0x158] sm:$0xf]
    %v2268 = vld [vmem:[#allocation10 + $0x15c] sm:$0xf]
    %v2269 = vld [vmem:[#allocation10 + $0x160] sm:$0xf]
    %v2270 = vld [vmem:[#allocation10 + $0x164] sm:$0xf]
    %v2271 = vld [vmem:[#allocation10 + $0x168] sm:$0xf]
    %v2272 = vld [vmem:[#allocation10 + $0x16c] sm:$0xf]
    %v2273 = vld [vmem:[#allocation10 + $0x170] sm:$0xf]
    %v2274 = vld [vmem:[#allocation10 + $0x174] sm:$0xf]
    %v2275 = vld [vmem:[#allocation10 + $0x178] sm:$0xf]
    %v2276 = vld [vmem:[#allocation10 + $0x17c] sm:$0xf]
    %v2309 = vunpack.c.l.b16 %v2245
    %v2310 = vunpack.c.l.b16 %v2246
    %v2311 = vunpack.c.l.b16 %v2247
    %v2312 = vunpack.c.l.b16 %v2248
    %v2313 = vunpack.c.l.b16 %v2249
    %v2314 = vunpack.c.l.b16 %v2250
    %v2315 = vunpack.c.l.b16 %v2251
    %v2316 = vunpack.c.l.b16 %v2252
    %v2317 = vunpack.c.l.b16 %v2253
    %v2318 = vunpack.c.l.b16 %v2254
    %v2319 = vunpack.c.l.b16 %v2255
    %v2320 = vunpack.c.l.b16 %v2256
    %v2321 = vunpack.c.l.b16 %v2257
    %v2322 = vunpack.c.l.b16 %v2258
    %v2323 = vunpack.c.l.b16 %v2259
    %v2324 = vunpack.c.l.b16 %v2260
    %v2325 = vunpack.c.l.b16 %v2261
    %v2326 = vunpack.c.l.b16 %v2262
    %v2327 = vunpack.c.l.b16 %v2263
    %v2328 = vunpack.c.l.b16 %v2264
    %v2329 = vunpack.c.l.b16 %v2265
    %v2330 = vunpack.c.l.b16 %v2266
    %v2331 = vunpack.c.l.b16 %v2267
    %v2332 = vunpack.c.l.b16 %v2268
    %v2333 = vunpack.c.l.b16 %v2269
    %v2334 = vunpack.c.l.b16 %v2270
    %v2335 = vunpack.c.l.b16 %v2271
    %v2336 = vunpack.c.l.b16 %v2272
    %v2337 = vunpack.c.l.b16 %v2273
    %v2338 = vunpack.c.l.b16 %v2274
    %v2339 = vunpack.c.l.b16 %v2275
    %v2340 = vunpack.c.l.b16 %v2276
    %v2341 = vpack.c.b16 %v2310, %v2309
    %v2342 = vpack.c.b16 %v2312, %v2311
    %v2343 = vpack.c.b16 %v2314, %v2313
    %v2344 = vpack.c.b16 %v2316, %v2315
    %v2345 = vpack.c.b16 %v2318, %v2317
    %v2346 = vpack.c.b16 %v2320, %v2319
    %v2347 = vpack.c.b16 %v2322, %v2321
    %v2348 = vpack.c.b16 %v2324, %v2323
    %v2349 = vpack.c.b16 %v2326, %v2325
    %v2350 = vpack.c.b16 %v2328, %v2327
    %v2351 = vpack.c.b16 %v2330, %v2329
    %v2352 = vpack.c.b16 %v2332, %v2331
    %v2353 = vpack.c.b16 %v2334, %v2333
    %v2354 = vpack.c.b16 %v2336, %v2335
    %v2355 = vpack.c.b16 %v2338, %v2337
    %v2356 = vpack.c.b16 %v2340, %v2339
    %2373 = vmatprep.subr.bf16.mxu0 0
    %2374 = vmatpush1.bf16.msra.mxu0 %v2341
    %2375 = vmatprep.subr.bf16.mxu0 0
    %2376 = vmatpush1.bf16.msra.mxu0 %v2342
    %2377 = vmatprep.subr.bf16.mxu0 0
    %2378 = vmatpush1.bf16.msra.mxu0 %v2343
    %2379 = vmatprep.subr.bf16.mxu0 0
    %2380 = vmatpush1.bf16.msra.mxu0 %v2344
    %2381 = vmatprep.subr.bf16.mxu0 0
    %2382 = vmatpush1.bf16.msra.mxu0 %v2345
    %2383 = vmatprep.subr.bf16.mxu0 0
    %2384 = vmatpush1.bf16.msra.mxu0 %v2346
    %2385 = vmatprep.subr.bf16.mxu0 0
    %2386 = vmatpush1.bf16.msra.mxu0 %v2347
    %2387 = vmatprep.subr.bf16.mxu0 0
    %2388 = vmatpush1.bf16.msra.mxu0 %v2348
    %2389 = vmatprep.subr.bf16.mxu0 0
    %2390 = vmatpush1.bf16.msra.mxu0 %v2349
    %2391 = vmatprep.subr.bf16.mxu0 0
    %2392 = vmatpush1.bf16.msra.mxu0 %v2350
    %2393 = vmatprep.subr.bf16.mxu0 0
    %2394 = vmatpush1.bf16.msra.mxu0 %v2351
    %2395 = vmatprep.subr.bf16.mxu0 0
    %2396 = vmatpush1.bf16.msra.mxu0 %v2352
    %2397 = vmatprep.subr.bf16.mxu0 0
    %2398 = vmatpush1.bf16.msra.mxu0 %v2353
    %2399 = vmatprep.subr.bf16.mxu0 0
    %2400 = vmatpush1.bf16.msra.mxu0 %v2354
    %2401 = vmatprep.subr.bf16.mxu0 0
    %2402 = vmatpush1.bf16.msra.mxu0 %v2355
    %2403 = vmatprep.subr.bf16.mxu0 0
    %2404 = vmatpush1.bf16.msra.mxu0 %v2356
    %2405 = vmatprep.mubr.bf16.mxu0 %v2242
    %2406 = vmatmul.mubr.bf16.gmra.mrb[0].mxu0 %v2241
    %v2407 = vpop.f32.mrb[0].mxu0
    %v2408 = vadd.f32 0.0, %v2407
    %v2409 = vpop.f32.mrb[0].mxu0
    %v2410 = vpop.f32.mrb[0].mxu0
    %v2411 = vadd.f32 0.0, %v2410
    %v2412 = vpop.f32.mrb[0].mxu0
    %2413 = vmatprep.mubr.bf16.mxu0 %v2244
    %2414 = vmatmul.mubr.bf16.gmra.mrb[0].mxu0 %v2243
    %v2415 = vpop.f32.mrb[0].mxu0
    %v2416 = vadd.f32 0.0, %v2415
    %v2417 = vpop.f32.mrb[0].mxu0
    %v2418 = vpop.f32.mrb[0].mxu0
    %v2419 = vadd.f32 0.0, %v2418
    %v2420 = vpop.f32.mrb[0].mxu0
    %2421 = vdwg.mxu0
    %v2422 = vadd.f32 %v2227, %v2408
    %v2423 = vadd.f32 %v2230, %v2411
    %v2424 = vadd.f32 %v2235, %v2416
    %v2425 = vadd.f32 %v2238, %v2419
    %v2426 = vld [vmem:[%s8] sm:$0x1]
    %v2428 = vlaneseq
    %v2429 = vshrl.u32 %v2428, 7
    %v2430 = vsub.s32 0, %v2429
    %v2431 = vrot.slane %v2426, %v2430
    %v2433 = vadd.f32 %v2422, %v2431
    %v2434 = vadd.f32 %v2423, %v2431
    %v2435 = vadd.f32 %v2424, %v2431
    %v2436 = vadd.f32 %v2425, %v2431
    %v2437 = vmax.f32 %v2433, 0.0
    %v2438 = vmax.f32 %v2434, 0.0
    %v2439 = vmax.f32 %v2435, 0.0
    %v2440 = vmax.f32 %v2436, 0.0
    %v2441 = vadd.f32 %v2437, %v2438
    %v2442 = vrot.slane %v2441, 4
    %v2443 = vadd.f32 %v2441, %v2442
    %v2444 = vrot.slane %v2443, 2
    %v2445 = vadd.f32 %v2443, %v2444
    %v2446 = vrot.slane %v2445, 1
    %v2447 = vadd.f32 %v2445, %v2446
    %v2448 = vadd.f32 %v2439, %v2440
    %v2449 = vrot.slane %v2448, 4
    %v2450 = vadd.f32 %v2448, %v2449
    %v2451 = vrot.slane %v2450, 2
    %v2452 = vadd.f32 %v2450, %v2451
    %v2453 = vrot.slane %v2452, 1
    %v2454 = vadd.f32 %v2452, %v2453
    %v2455 = vpack.c.bf16 %v2447, %v2447
    %v2456 = vpack.c.bf16 %v2454, %v2454
    %v2457 = vld [vmem:[#allocation11] sm:$0xf]
    %v2458 = vld [vmem:[#allocation11 + $0x4] sm:$0xf]
    %v2459 = vld [vmem:[#allocation11 + $0x8] sm:$0xf]
    %v2460 = vld [vmem:[#allocation11 + $0xc] sm:$0xf]
    %v2461 = vld [vmem:[#allocation11 + $0x10] sm:$0xf]
    %v2462 = vld [vmem:[#allocation11 + $0x14] sm:$0xf]
    %v2463 = vld [vmem:[#allocation11 + $0x18] sm:$0xf]
    %v2464 = vld [vmem:[#allocation11 + $0x1c] sm:$0xf]
    %v2465 = vld [vmem:[#allocation11 + $0x20] sm:$0xf]
    %v2466 = vld [vmem:[#allocation11 + $0x24] sm:$0xf]
    %v2467 = vld [vmem:[#allocation11 + $0x28] sm:$0xf]
    %v2468 = vld [vmem:[#allocation11 + $0x2c] sm:$0xf]
    %v2469 = vld [vmem:[#allocation11 + $0x30] sm:$0xf]
    %v2470 = vld [vmem:[#allocation11 + $0x34] sm:$0xf]
    %v2471 = vld [vmem:[#allocation11 + $0x38] sm:$0xf]
    %v2472 = vld [vmem:[#allocation11 + $0x3c] sm:$0xf]
    %v2473 = vld [vmem:[%s10] sm:$0x1]
    %v2475 = vlaneseq
    %v2476 = vshrl.u32 %v2475, 7
    %v2477 = vsub.s32 0, %v2476
    %v2478 = vrot.slane %v2473, %v2477
    %v2482 = vunpack.c.l.b16 %v2455
    %v2483 = vunpack.c.l.b16 %v2456
    %vm2484 = vcmask 1041409
    %v2485 = vsel %vm2484, %v2483, %v2482
    %v2486 = vpack.c.b16 %v2485, %v2485
    %v2504 = vunpack.c.l.b16 %v2457
    %v2505 = vunpack.c.l.b16 %v2458
    %v2506 = vunpack.c.l.b16 %v2459
    %v2507 = vunpack.c.l.b16 %v2460
    %v2508 = vunpack.c.l.b16 %v2461
    %v2509 = vunpack.c.l.b16 %v2462
    %v2510 = vunpack.c.l.b16 %v2463
    %v2511 = vunpack.c.l.b16 %v2464
    %v2512 = vunpack.c.l.b16 %v2465
    %v2513 = vunpack.c.l.b16 %v2466
    %v2514 = vunpack.c.l.b16 %v2467
    %v2515 = vunpack.c.l.b16 %v2468
    %v2516 = vunpack.c.l.b16 %v2469
    %v2517 = vunpack.c.l.b16 %v2470
    %v2518 = vunpack.c.l.b16 %v2471
    %v2519 = vunpack.c.l.b16 %v2472
    %v2520 = vpack.c.b16 %v2505, %v2504
    %v2521 = vpack.c.b16 %v2507, %v2506
    %v2522 = vpack.c.b16 %v2509, %v2508
    %v2523 = vpack.c.b16 %v2511, %v2510
    %v2524 = vpack.c.b16 %v2513, %v2512
    %v2525 = vpack.c.b16 %v2515, %v2514
    %v2526 = vpack.c.b16 %v2517, %v2516
    %v2527 = vpack.c.b16 %v2519, %v2518
    %2536 = vmatprep.subr.bf16.mxu0 0
    %2537 = vmatpush1.bf16.msra.mxu0 %v2520
    %2538 = vmatprep.subr.bf16.mxu0 0
    %2539 = vmatpush1.bf16.msra.mxu0 %v2521
    %2540 = vmatprep.subr.bf16.mxu0 0
    %2541 = vmatpush1.bf16.msra.mxu0 %v2522
    %2542 = vmatprep.subr.bf16.mxu0 0
    %2543 = vmatpush1.bf16.msra.mxu0 %v2523
    %2544 = vmatprep.subr.bf16.mxu0 0
    %2545 = vmatpush1.bf16.msra.mxu0 %v2524
    %2546 = vmatprep.subr.bf16.mxu0 0
    %2547 = vmatpush1.bf16.msra.mxu0 %v2525
    %2548 = vmatprep.subr.bf16.mxu0 0
    %2549 = vmatpush1.bf16.msra.mxu0 %v2526
    %2550 = vmatprep.subr.bf16.mxu0 0
    %2551 = vmatpush1.bf16.msra.mxu0 %v2527
    %2552 = vmatprep.subr.bf16.mxu0 0
    %2553 = vmatpush1.bf16.msra.mxu0 0
    %2554 = vmatprep.subr.bf16.mxu0 0
    %2555 = vmatpush1.bf16.msra.mxu0 0
    %2556 = vmatprep.subr.bf16.mxu0 0
    %2557 = vmatpush1.bf16.msra.mxu0 0
    %2558 = vmatprep.subr.bf16.mxu0 0
    %2559 = vmatpush1.bf16.msra.mxu0 0
    %2560 = vmatprep.subr.bf16.mxu0 0
    %2561 = vmatpush1.bf16.msra.mxu0 0
    %2562 = vmatprep.subr.bf16.mxu0 0
    %2563 = vmatpush1.bf16.msra.mxu0 0
    %2564 = vmatprep.subr.bf16.mxu0 0
    %2565 = vmatpush1.bf16.msra.mxu0 0
    %2566 = vmatprep.subr.bf16.mxu0 0
    %2567 = vmatpush1.bf16.msra.mxu0 0
    %2568 = vmatprep.mubr.bf16.mxu0 0
    %2569 = vmatmul.mubr.bf16.gmra.mrb[0].mxu0 %v2486
    %v2570 = vpop.f32.mrb[0].mxu0
    %v2571 = vadd.f32 %v2478, %v2570
    %v2572 = vpop.f32.mrb[0].mxu0
    %v2573 = vpop.f32.mrb[0].mxu0
    %v2574 = vpop.f32.mrb[0].mxu0
    %2575 = vdwg.mxu0
    %v2576 = vmax.f32 %v2571, 0.0
    %v2577 = vpack.c.bf16 %v2576, %v2576
    %v2578 = vld [vmem:[#allocation13] sm:$0xf]
    %v2579 = vld [vmem:[#allocation13 + $0x4] sm:$0xf]
    %v2580 = vld [vmem:[#allocation13 + $0x8] sm:$0xf]
    %v2581 = vld [vmem:[#allocation13 + $0xc] sm:$0xf]
    %v2582 = vld [vmem:[#allocation13 + $0x10] sm:$0xf]
    %v2583 = vld [vmem:[#allocation13 + $0x14] sm:$0xf]
    %v2584 = vld [vmem:[#allocation13 + $0x18] sm:$0xf]
    %v2585 = vld [vmem:[#allocation13 + $0x1c] sm:$0xf]
    %v2586 = vld [vmem:[#allocation13 + $0x20] sm:$0xf]
    %v2587 = vld [vmem:[#allocation13 + $0x24] sm:$0xf]
    %v2588 = vld [vmem:[#allocation13 + $0x28] sm:$0xf]
    %v2589 = vld [vmem:[#allocation13 + $0x2c] sm:$0xf]
    %v2590 = vld [vmem:[#allocation13 + $0x30] sm:$0xf]
    %v2591 = vld [vmem:[#allocation13 + $0x34] sm:$0xf]
    %v2592 = vld [vmem:[#allocation13 + $0x38] sm:$0xf]
    %v2593 = vld [vmem:[#allocation13 + $0x3c] sm:$0xf]
    %v2594 = vld [vmem:[%s12] sm:$0x1]
    %v2596 = vlaneseq
    %v2597 = vshrl.u32 %v2596, 7
    %v2598 = vsub.s32 0, %v2597
    %v2599 = vrot.slane %v2594, %v2598
    %v2617 = vunpack.c.l.b16 %v2578
    %v2618 = vunpack.c.l.b16 %v2579
    %v2619 = vunpack.c.l.b16 %v2580
    %v2620 = vunpack.c.l.b16 %v2581
    %v2621 = vunpack.c.l.b16 %v2582
    %v2622 = vunpack.c.l.b16 %v2583
    %v2623 = vunpack.c.l.b16 %v2584
    %v2624 = vunpack.c.l.b16 %v2585
    %v2625 = vunpack.c.l.b16 %v2586
    %v2626 = vunpack.c.l.b16 %v2587
    %v2627 = vunpack.c.l.b16 %v2588
    %v2628 = vunpack.c.l.b16 %v2589
    %v2629 = vunpack.c.l.b16 %v2590
    %v2630 = vunpack.c.l.b16 %v2591
    %v2631 = vunpack.c.l.b16 %v2592
    %v2632 = vunpack.c.l.b16 %v2593
    %v2633 = vpack.c.b16 %v2618, %v2617
    %v2634 = vpack.c.b16 %v2620, %v2619
    %v2635 = vpack.c.b16 %v2622, %v2621
    %v2636 = vpack.c.b16 %v2624, %v2623
    %v2637 = vpack.c.b16 %v2626, %v2625
    %v2638 = vpack.c.b16 %v2628, %v2627
    %v2639 = vpack.c.b16 %v2630, %v2629
    %v2640 = vpack.c.b16 %v2632, %v2631
    %2649 = vmatprep.subr.bf16.mxu0 0
    %2650 = vmatpush1.bf16.msra.mxu0 %v2633
    %2651 = vmatprep.subr.bf16.mxu0 0
    %2652 = vmatpush1.bf16.msra.mxu0 %v2634
    %2653 = vmatprep.subr.bf16.mxu0 0
    %2654 = vmatpush1.bf16.msra.mxu0 %v2635
    %2655 = vmatprep.subr.bf16.mxu0 0
    %2656 = vmatpush1.bf16.msra.mxu0 %v2636
    %2657 = vmatprep.subr.bf16.mxu0 0
    %2658 = vmatpush1.bf16.msra.mxu0 %v2637
    %2659 = vmatprep.subr.bf16.mxu0 0
    %2660 = vmatpush1.bf16.msra.mxu0 %v2638
    %2661 = vmatprep.subr.bf16.mxu0 0
    %2662 = vmatpush1.bf16.msra.mxu0 %v2639
    %2663 = vmatprep.subr.bf16.mxu0 0
    %2664 = vmatpush1.bf16.msra.mxu0 %v2640
    %2665 = vmatprep.subr.bf16.mxu0 0
    %2666 = vmatpush1.bf16.msra.mxu0 0
    %2667 = vmatprep.subr.bf16.mxu0 0
    %2668 = vmatpush1.bf16.msra.mxu0 0
    %2669 = vmatprep.subr.bf16.mxu0 0
    %2670 = vmatpush1.bf16.msra.mxu0 0
    %2671 = vmatprep.subr.bf16.mxu0 0
    %2672 = vmatpush1.bf16.msra.mxu0 0
    %2673 = vmatprep.subr.bf16.mxu0 0
    %2674 = vmatpush1.bf16.msra.mxu0 0
    %2675 = vmatprep.subr.bf16.mxu0 0
    %2676 = vmatpush1.bf16.msra.mxu0 0
    %2677 = vmatprep.subr.bf16.mxu0 0
    %2678 = vmatpush1.bf16.msra.mxu0 0
    %2679 = vmatprep.subr.bf16.mxu0 0
    %2680 = vmatpush1.bf16.msra.mxu0 0
    %2681 = vmatprep.mubr.bf16.mxu0 0
    %2682 = vmatmul.mubr.bf16.gmra.mrb[0].mxu0 %v2577
    %v2683 = vpop.f32.mrb[0].mxu0
    %v2684 = vadd.f32 %v2599, %v2683
    %v2685 = vpop.f32.mrb[0].mxu0
    %v2686 = vpop.f32.mrb[0].mxu0
    %v2687 = vpop.f32.mrb[0].mxu0
    %2688 = vdwg.mxu0
    %2689 = vst [vmem:[#allocation14] sm:$0x3] %v2684
    // Predicated region
    $region82: #{model2_forward.1} parent=1 // pred_check
      _
    $region83: #{model2_forward.1} parent=1 // pred_check_branch
      %2691 = sbr.rel (0) target = $region85
    $region84: #{model2_forward.1} parent=1 // pred_region
      %s2693 = ssub.s32 32, 32
      %2694 = vsyncadd [#allocation4], %s2693
      %s2696 = sshll.u32 [#allocation14], 4
      %s2697 = int_to_ptr.vmem [resolvable:$true] %s2696
      %2699 = dma.vmem_to_hbm [thread:$0]  %s2697, 32, %s13, [#allocation4]
    $region85: #{model2_forward.1} parent=1 // pred_fallthru
      _
    // Predicated region
    $region86: #{model2_forward.1} parent=1 // pred_check
      _
    $region87: #{model2_forward.1} parent=1 // pred_check_branch
      %2701 = sbr.rel (0) target = $region89
    $region88: #{model2_forward.1} parent=1 // pred_region
      %2702 = dma.done [#allocation4], 32
    $region89: #{model2_forward.1} parent=1 // pred_fallthru
      _
    %2703 = vsyncpa [#allocation3], 1
    %2704 = vsyncpa [#allocation6], 1
    %2705 = vsyncpa [#allocation9], 1
    %2706 = vsyncpa [#allocation12], 1
    %2707 = vsyncpa [#allocation4], 1

</llo_original>
